<compile_context>
chip_gen: v5e
topology: v5e:2x2
jax: 0.10.0
libtpu: 0.0.40
codegen_flags: <defaults>
</compile_context>

<pallas_src>
import math

import jax
import jax.numpy as jnp
from jax.experimental import pallas as pl
from jax.experimental.pallas import tpu as pltpu


# ----------------------------- in-kernel math helpers -----------------------------

def _layer_norm(x, g, b, eps=1e-5):
    # matches torch.nn.LayerNorm (biased variance, eps inside sqrt); f32 math
    mu = jnp.mean(x, axis=-1, keepdims=True)
    var = jnp.mean(jnp.square(x - mu), axis=-1, keepdims=True)
    return (x - mu) * jax.lax.rsqrt(var + eps) * g + b


def _softmax_lastdim(x):
    m = jnp.max(x, axis=-1, keepdims=True)
    e = jnp.exp(x - m)
    # approx reciprocal runs on the EUP slot; ~1e-3 relative error is fine here
    return e * pl.reciprocal(jnp.sum(e, axis=-1, keepdims=True), approx=True)


def _gelu_erf(x):
    # torch.nn.GELU() default (erf-based) via the A&S 7.1.26 polynomial
    # (~1.5e-7 abs err).  Exact divide (review correctness note).
    a1, a2, a3, a4, a5 = 0.254829592, -0.284496736, 1.421413741, -1.453152027, 1.061405429
    p = 0.3275911
    s = x * (1.0 / math.sqrt(2.0))
    ax = jnp.abs(s)
    t = 1.0 / (1.0 + p * ax)
    poly = ((((a5 * t + a4) * t + a3) * t + a2) * t + a1) * t
    y = 1.0 - poly * jnp.exp(-ax * ax)
    erf = jnp.where(s >= 0, y, -y)
    return 0.5 * x * (1.0 + erf)


# --------------------------------- Pallas kernel ----------------------------------

def _make_transformer_kernel(heads, dim_head, bt, n_pad, n_real, dim):
    inner = heads * dim_head
    bf16 = jnp.bfloat16
    need_mask = n_pad != n_real

    def split_heads(t2d):
        # (bt*n, heads*dim_head) bf16 -> (heads*bt, n, dim_head)
        # lane slices + one leading-axis stack + a pure (free) reshape; avoids
        # mixed major/minor transposes that Mosaic may not lower.
        hs = jnp.stack(
            [t2d[:, h * dim_head:(h + 1) * dim_head] for h in range(heads)], axis=0)
        return hs.reshape(heads * bt, n_pad, dim_head)

    def merge_heads(t3):
        # (heads*bt, n, dim_head) bf16 -> (bt*n, heads*dim_head)  (inverse)
        t = t3.reshape(heads, bt * n_pad, dim_head)
        return jnp.concatenate([t[h] for h in range(heads)], axis=-1)

    def kernel(x_ref, wqkv_ref, wo_ref, w1_ref, w2_ref,
               vecd_ref, b1_ref, lnf_ref, o_ref, x_acc):
        layer = pl.program_id(1)

        @pl.when(layer == 0)
        def _():
            x_acc[...] = x_ref[...].reshape(bt * n_pad, dim).astype(jnp.float32)

        x = x_acc[...]                    # (bt*n, D) f32 resident residual stream
        vd = vecd_ref[0]                  # (6, D): ln1g, ln1b, bo, ln2g, ln2b, b2

        # ---------------- Attention block (pre-LN + residual) ----------------
        # 1/sqrt(dim_head) is already folded into the Wq columns (prepare_params).
        xn = _layer_norm(x, vd[0:1, :], vd[1:2, :]).astype(bf16)
        qkv = jnp.dot(xn, wqkv_ref[0],
                      preferred_element_type=jnp.float32).astype(bf16)  # (bt*n, 3*inner)
        q = split_heads(qkv[:, 0 * inner:1 * inner])                     # (H*bt, n, dh)
        k = split_heads(qkv[:, 1 * inner:2 * inner])
        v = split_heads(qkv[:, 2 * inner:3 * inner])

        dots = jnp.einsum('bnd,bmd->bnm', q, k,
                          preferred_element_type=jnp.float32)            # (H*bt, n, n)
        if need_mask:   # mask padded key tokens (only emitted when n_pad > n_real)
            key_ok = jax.lax.broadcasted_iota(jnp.int32, (1, 1, n_pad), 2) < n_real
            dots = jnp.where(key_ok, dots, -1e30)
        attn = _softmax_lastdim(dots).astype(bf16)                       # dropout(0)=id
        out = jnp.einsum('bnm,bmd->bnd', attn, v,
                         preferred_element_type=jnp.float32)             # (H*bt, n, dh)
        # Concat heads on lanes, then ONE (bt*n, inner)@(inner, D) MXU matmul:
        # cross-head reduction happens in the MXU accumulator (no (H,N,D) f32
        # intermediate, no per-head VPU adds).
        ctx = merge_heads(out.astype(bf16))                              # (bt*n, inner)
        x = jnp.dot(ctx, wo_ref[0],
                    preferred_element_type=jnp.float32) + vd[2:3, :] + x

        # ---------------- FeedForward block (pre-LN + residual) ----------------
        xn = _layer_norm(x, vd[3:4, :], vd[4:5, :]).astype(bf16)
        h = jnp.dot(xn, w1_ref[0], preferred_element_type=jnp.float32) + b1_ref[0]
        h = _gelu_erf(h).astype(bf16)
        x = jnp.dot(h, w2_ref[0],
                    preferred_element_type=jnp.float32) + vd[5:6, :] + x

        x_acc[...] = x

        @pl.when(layer == pl.num_programs(1) - 1)
        def _():
            lnf = lnf_ref[...]                                           # (2, D)
            y = _layer_norm(x, lnf[0:1, :], lnf[1:2, :])
            o_ref[...] = y.reshape(o_ref.shape).astype(o_ref.dtype)

    return kernel


# ------------------------------------ wrapper --------------------------------------

def _vmem_limit_bytes():
    mib = 1024 * 1024
    try:
        cap = int(pltpu.get_tpu_info().vmem_capacity_bytes)
    except Exception:
        cap = 64 * mib  # conservative fallback (v7x physical per-TC VMEM)
    # leave ~16 MiB headroom; clamp to [32 MiB, 100 MiB]
    return int(min(max(cap - 16 * mib, 32 * mib), 100 * mib))


def _pick_batch_block(batch):
    # Largest Bt <= 8 dividing B; prefer leaving the (parallel) batch grid axis
    # with extent >= 2 so both v7x TensorCores stay busy.
    divs = [d for d in range(1, 9) if batch % d == 0]
    pref = [d for d in divs if batch // d >= 2]
    return max(pref) if pref else max(divs)


def prepare_params(params, *, heads, dim_head):
    """One-time weight prep (call ONCE, outside the hot path): cast big matrices
    to bf16, fold the attention scale into Wq, pack small per-layer vectors."""
    inner = heads * dim_head
    scale = dim_head ** (-0.5)
    bf16, f32 = jnp.bfloat16, jnp.float32
    wqkv = params["wqkv"]
    wqkv = jnp.concatenate([wqkv[..., :inner] * scale, wqkv[..., inner:]], axis=-1)
    return dict(
        wqkv=wqkv.astype(bf16),                                         # (depth, D, 3*inner)
        wo=params["wo"].astype(bf16),                                   # (depth, inner, D)
        w1=params["w1"].astype(bf16),                                   # (depth, D, mlp)
        w2=params["w2"].astype(bf16),                                   # (depth, mlp, D)
        vecd=jnp.concatenate([params["ln1g"], params["ln1b"], params["bo"],
                              params["ln2g"], params["ln2b"], params["b2"]],
                             axis=1).astype(f32),                       # (depth, 6, D)
        b1=params["b1"].astype(f32),                                    # (depth, 1, mlp)
        lnf=jnp.concatenate([params["lnfg"], params["lnfb"]],
                            axis=0).astype(f32),                        # (2, D)
    )


def transformer_pallas(x, prepped, *, heads, dim_head, batch_block=None):
    B, N, D = x.shape
    depth = prepped["wqkv"].shape[0]
    inner = heads * dim_head
    mlp = prepped["w1"].shape[-1]

    bt = batch_block if batch_block is not None else _pick_batch_block(B)
    assert B % bt == 0, f"batch {B} must be divisible by batch_block {bt}"

    # pad tokens to a sublane multiple (padded keys are masked in the kernel)
    n_pad = -(-N // 8) * 8
    xp = x if n_pad == N else jnp.pad(x, ((0, 0), (0, n_pad - N), (0, 0)))

    kernel = _make_transformer_kernel(heads, dim_head, bt, n_pad, N, D)

    in_specs = [
        pl.BlockSpec((bt, n_pad, D), lambda b, l: (b, 0, 0)),            # x (Bt images)
        pl.BlockSpec((1, D, 3 * inner), lambda b, l: (l, 0, 0)),         # wqkv (per layer)
        pl.BlockSpec((1, inner, D), lambda b, l: (l, 0, 0)),             # wo   (per layer)
        pl.BlockSpec((1, D, mlp), lambda b, l: (l, 0, 0)),               # w1   (per layer)
        pl.BlockSpec((1, mlp, D), lambda b, l: (l, 0, 0)),               # w2   (per layer)
        pl.BlockSpec((1, 6, D), lambda b, l: (l, 0, 0)),                 # packed LN/bias
        pl.BlockSpec((1, 1, mlp), lambda b, l: (l, 0, 0)),               # b1
        pl.BlockSpec((2, D), lambda b, l: (0, 0)),                       # final LN params
    ]

    out = pl.pallas_call(
        kernel,
        out_shape=jax.ShapeDtypeStruct((B, n_pad, D), x.dtype),
        grid=(B // bt, depth),
        in_specs=in_specs,
        out_specs=pl.BlockSpec((bt, n_pad, D), lambda b, l: (b, 0, 0)),
        scratch_shapes=[pltpu.VMEM((bt * n_pad, D), jnp.float32)],       # resident x
        compiler_params=pltpu.CompilerParams(
            dimension_semantics=("parallel", "arbitrary"),
            vmem_limit_bytes=_vmem_limit_bytes()),
    )(xp, prepped["wqkv"], prepped["wo"], prepped["w1"], prepped["w2"],
      prepped["vecd"], prepped["b1"], prepped["lnf"])

    return out if n_pad == N else out[:, :N, :]


# ------------------------------ parameter init (synthetic) ------------------------

def init_params(key, depth, dim, inner_dim, mlp_dim):
    ks = jax.random.split(key, 10)
    std = 0.02
    f32 = jnp.float32
    return dict(
        ln1g=(1.0 + 0.1 * jax.random.normal(ks[0], (depth, 1, dim), f32)),
        ln1b=(0.1 * jax.random.normal(ks[1], (depth, 1, dim), f32)),
        wqkv=std * jax.random.normal(ks[2], (depth, dim, 3 * inner_dim), f32),
        wo=std * jax.random.normal(ks[3], (depth, inner_dim, dim), f32),
        bo=std * jax.random.normal(ks[4], (depth, 1, dim), f32),
        ln2g=(1.0 + 0.1 * jax.random.normal(ks[5], (depth, 1, dim), f32)),
        ln2b=(0.1 * jax.random.normal(ks[6], (depth, 1, dim), f32)),
        w1=std * jax.random.normal(ks[7], (depth, dim, mlp_dim), f32),
        b1=std * jax.random.normal(ks[8], (depth, 1, mlp_dim), f32),
        w2=std * jax.random.normal(ks[9], (depth, mlp_dim, dim), f32),
        b2=jnp.zeros((depth, 1, dim), f32),
        lnfg=jnp.ones((1, dim), f32),
        lnfb=jnp.zeros((1, dim), f32),
    )


# ------------------------------ plain-JAX reference (f32) --------------------------

def transformer_reference(x, p, *, depth, heads, dim_head):
    def ln(t, g, b, eps=1e-5):
        mu = t.mean(-1, keepdims=True)
        var = ((t - mu) ** 2).mean(-1, keepdims=True)
        return (t - mu) / jnp.sqrt(var + eps) * g + b

    B, N, D = x.shape
    inner_dim = heads * dim_head
    scale = dim_head ** (-0.5)
    for l in range(depth):
        xn = ln(x, p["ln1g"][l, 0], p["ln1b"][l, 0])
        qkv = xn @ p["wqkv"][l]
        q, k, v = jnp.split(qkv, 3, axis=-1)
        rs = lambda t: t.reshape(B, N, heads, dim_head).transpose(0, 2, 1, 3)
        q, k, v = rs(q), rs(k), rs(v)
        dots = jnp.einsum("bhnd,bhmd->bhnm", q, k) * scale
        attn = jax.nn.softmax(dots, axis=-1)
        out = jnp.einsum("bhnm,bhmd->bhnd", attn, v)
        out = out.transpose(0, 2, 1, 3).reshape(B, N, inner_dim)
        x = out @ p["wo"][l] + p["bo"][l, 0] + x
        xn = ln(x, p["ln2g"][l, 0], p["ln2b"][l, 0])
        h1 = jax.nn.gelu(xn @ p["w1"][l] + p["b1"][l, 0], approximate=False)
        x = h1 @ p["w2"][l] + p["b2"][l, 0] + x
    return ln(x, p["lnfg"][0], p["lnfb"][0])


# --------------------------------------- main --------------------------------------

if __name__ == "__main__":
    B, N, DIM = 4, 8, 32
    DEPTH, HEADS, DIM_HEAD, MLP_DIM = 2, 4, 8, 64
    INNER = HEADS * DIM_HEAD

    key = jax.random.PRNGKey(0)
    kx, kp = jax.random.split(key)
    x = jax.random.normal(kx, (B, N, DIM), jnp.float32)
    params = init_params(kp, DEPTH, DIM, INNER, MLP_DIM)

    # one-time weight preparation (bf16 cast, scale folding, vector packing)
    prepped = prepare_params(params, heads=HEADS, dim_head=DIM_HEAD)

    out = transformer_pallas(x, prepped, heads=HEADS, dim_head=DIM_HEAD)
    out = jax.block_until_ready(out)

    ref = transformer_reference(x, params, depth=DEPTH, heads=HEADS, dim_head=DIM_HEAD)
    assert out.shape == (B, N, DIM)
    # bf16 MXU inputs + approx EUP reciprocal in softmax vs full-f32 reference
    max_diff = float(jnp.max(jnp.abs(out - ref)))
    assert bool(jnp.allclose(out, ref, atol=2e-2, rtol=2e-2)), (
        f"max abs diff = {max_diff}")

    print("KERNEL_OK")
</pallas_src>

<mosaic_0001>
module attributes {stable_mosaic.version = 11 : i64} {
  func.func @kernel(%arg0: i32, %arg1: i32, %arg2: memref<2x8x32xf32, #tpu.memory_space<vmem>>, %arg3: memref<1x32x96xbf16, #tpu.memory_space<vmem>>, %arg4: memref<1x32x32xbf16, #tpu.memory_space<vmem>>, %arg5: memref<1x32x64xbf16, #tpu.memory_space<vmem>>, %arg6: memref<1x64x32xbf16, #tpu.memory_space<vmem>>, %arg7: memref<1x6x32xf32, #tpu.memory_space<vmem>>, %arg8: memref<1x1x64xf32, #tpu.memory_space<vmem>>, %arg9: memref<2x32xf32, #tpu.memory_space<vmem>>, %arg10: memref<2x8x32xf32, #tpu.memory_space<vmem>>, %arg11: memref<16x32xf32, #tpu.memory_space<vmem>>) attributes {dimension_semantics = [#tpu.dimension_semantics<parallel>, #tpu.dimension_semantics<arbitrary>], iteration_bounds = array<i64: 2, 2>, scalar_prefetch = 0 : i64, scratch_operands = 1 : i64, tpu.core_type = #tpu.core_type<tc>, window_params = [{transform_indices = @transform_0, window_bounds = array<i64: 2, 8, 32>}, {transform_indices = @transform_1, window_bounds = array<i64: 1, 32, 96>}, {transform_indices = @transform_2, window_bounds = array<i64: 1, 32, 32>}, {transform_indices = @transform_3, window_bounds = array<i64: 1, 32, 64>}, {transform_indices = @transform_4, window_bounds = array<i64: 1, 64, 32>}, {transform_indices = @transform_5, window_bounds = array<i64: 1, 6, 32>}, {transform_indices = @transform_6, window_bounds = array<i64: 1, 1, 64>}, {pipeline_mode = #tpu.pipeline_mode<synchronous>, transform_indices = @transform_7, window_bounds = array<i64: 2, 32>}, {transform_indices = @transform_8, window_bounds = array<i64: 2, 8, 32>}]} {
    %c0_i32 = arith.constant 0 : i32
    %0 = arith.cmpi eq, %arg1, %c0_i32 : i32
    %1 = arith.extui %0 : i1 to i32
    %c0_i32_0 = arith.constant 0 : i32
    %2 = arith.cmpi ne, %1, %c0_i32_0 : i32
    scf.if %2 {
      %c0_55 = arith.constant 0 : index
      %c0_56 = arith.constant 0 : index
      %c0_57 = arith.constant 0 : index
      %183 = vector.load %arg2[%c0_55, %c0_56, %c0_57] : memref<2x8x32xf32, #tpu.memory_space<vmem>>, vector<2x8x32xf32>
      %184 = vector.shape_cast %183 : vector<2x8x32xf32> to vector<16x32xf32>
      %c0_58 = arith.constant 0 : index
      %c0_59 = arith.constant 0 : index
      %185 = vector.load %arg11[%c0_58, %c0_59] : memref<16x32xf32, #tpu.memory_space<vmem>>, vector<16x32xf32>
      tpu.vector_store %arg11[%c0_58, %c0_59], %184 {strides = array<i32>} : memref<16x32xf32, #tpu.memory_space<vmem>>, vector<16x32xf32>,
    } else {
    }
    %c0 = arith.constant 0 : index
    %c0_1 = arith.constant 0 : index
    %3 = vector.load %arg11[%c0, %c0_1] : memref<16x32xf32, #tpu.memory_space<vmem>>, vector<16x32xf32>
    %c0_2 = arith.constant 0 : index
    %c0_3 = arith.constant 0 : index
    %c0_4 = arith.constant 0 : index
    %4 = vector.load %arg7[%c0_2, %c0_3, %c0_4] : memref<1x6x32xf32, #tpu.memory_space<vmem>>, vector<1x6x32xf32>
    %5 = vector.shape_cast %4 : vector<1x6x32xf32> to vector<6x32xf32>
    %6 = vector.extract_strided_slice %5 {offsets = [0, 0], sizes = [1, 32], strides = [1, 1]} : vector<6x32xf32> to vector<1x32xf32>
    %7 = vector.extract_strided_slice %5 {offsets = [1, 0], sizes = [1, 32], strides = [1, 1]} : vector<6x32xf32> to vector<1x32xf32>
    %cst = arith.constant dense<0.000000e+00> : vector<16xf32>
    %8 = vector.multi_reduction <add>, %3, %cst [1] : vector<16x32xf32> to vector<16xf32>
    %9 = vector.shape_cast %8 : vector<16xf32> to vector<16x1xf32>
    %cst_5 = arith.constant 3.200000e+01 : f32
    %10 = vector.broadcast %cst_5 : f32 to vector<16x1xf32>
    %11 = arith.divf %9, %10 : vector<16x1xf32>
    %12 = vector.broadcast %11 : vector<16x1xf32> to vector<16x32xf32>
    %13 = arith.subf %3, %12 : vector<16x32xf32>
    %14 = arith.mulf %13, %13 : vector<16x32xf32>
    %cst_6 = arith.constant dense<0.000000e+00> : vector<16xf32>
    %15 = vector.multi_reduction <add>, %14, %cst_6 [1] : vector<16x32xf32> to vector<16xf32>
    %16 = vector.shape_cast %15 : vector<16xf32> to vector<16x1xf32>
    %cst_7 = arith.constant 3.200000e+01 : f32
    %17 = vector.broadcast %cst_7 : f32 to vector<16x1xf32>
    %18 = arith.divf %16, %17 : vector<16x1xf32>
    %19 = vector.broadcast %11 : vector<16x1xf32> to vector<16x32xf32>
    %20 = arith.subf %3, %19 : vector<16x32xf32>
    %cst_8 = arith.constant 9.99999974E-6 : f32
    %21 = vector.broadcast %cst_8 : f32 to vector<16x1xf32>
    %22 = arith.addf %18, %21 : vector<16x1xf32>
    %23 = math.rsqrt %22 : vector<16x1xf32>
    %24 = vector.broadcast %23 : vector<16x1xf32> to vector<16x32xf32>
    %25 = arith.mulf %20, %24 : vector<16x32xf32>
    %26 = vector.broadcast %6 : vector<1x32xf32> to vector<16x32xf32>
    %27 = arith.mulf %25, %26 : vector<16x32xf32>
    %28 = vector.broadcast %7 : vector<1x32xf32> to vector<16x32xf32>
    %29 = arith.addf %27, %28 : vector<16x32xf32>
    %30 = arith.truncf %29 : vector<16x32xf32> to vector<16x32xbf16>
    %c0_9 = arith.constant 0 : index
    %c0_10 = arith.constant 0 : index
    %c0_11 = arith.constant 0 : index
    %31 = vector.load %arg3[%c0_9, %c0_10, %c0_11] : memref<1x32x96xbf16, #tpu.memory_space<vmem>>, vector<1x32x96xbf16>
    %32 = vector.shape_cast %31 : vector<1x32x96xbf16> to vector<32x96xbf16>
    %cst_12 = arith.constant dense<0.000000e+00> : vector<16x96xf32>
    %33 = tpu.matmul %30, %32, %cst_12 {dimension_numbers = #tpu.dot_dimension_numbers<[1], [0], [0], [1], [0, 0, 1, 1], [], []>} : vector<16x32xbf16>, vector<32x96xbf16>, vector<16x96xf32> -> vector<16x96xf32>
    %34 = arith.truncf %33 : vector<16x96xf32> to vector<16x96xbf16>
    %35 = vector.extract_strided_slice %34 {offsets = [0, 0], sizes = [16, 32], strides = [1, 1]} : vector<16x96xbf16> to vector<16x32xbf16>
    %36 = vector.extract_strided_slice %35 {offsets = [0, 0], sizes = [16, 8], strides = [1, 1]} : vector<16x32xbf16> to vector<16x8xbf16>
    %37 = vector.extract_strided_slice %35 {offsets = [0, 8], sizes = [16, 8], strides = [1, 1]} : vector<16x32xbf16> to vector<16x8xbf16>
    %38 = vector.extract_strided_slice %35 {offsets = [0, 16], sizes = [16, 8], strides = [1, 1]} : vector<16x32xbf16> to vector<16x8xbf16>
    %39 = vector.extract_strided_slice %35 {offsets = [0, 24], sizes = [16, 8], strides = [1, 1]} : vector<16x32xbf16> to vector<16x8xbf16>
    %40 = vector.shape_cast %36 : vector<16x8xbf16> to vector<1x16x8xbf16>
    %41 = vector.shape_cast %37 : vector<16x8xbf16> to vector<1x16x8xbf16>
    %42 = vector.shape_cast %38 : vector<16x8xbf16> to vector<1x16x8xbf16>
    %43 = vector.shape_cast %39 : vector<16x8xbf16> to vector<1x16x8xbf16>
    %44 = tpu.concatenate %40, %41, %42, %43 in 0 : vector<1x16x8xbf16>, vector<1x16x8xbf16>, vector<1x16x8xbf16>, vector<1x16x8xbf16> -> vector<4x16x8xbf16>
    %45 = vector.shape_cast %44 : vector<4x16x8xbf16> to vector<8x8x8xbf16>
    %46 = vector.extract_strided_slice %34 {offsets = [0, 32], sizes = [16, 32], strides = [1, 1]} : vector<16x96xbf16> to vector<16x32xbf16>
    %47 = vector.extract_strided_slice %46 {offsets = [0, 0], sizes = [16, 8], strides = [1, 1]} : vector<16x32xbf16> to vector<16x8xbf16>
    %48 = vector.extract_strided_slice %46 {offsets = [0, 8], sizes = [16, 8], strides = [1, 1]} : vector<16x32xbf16> to vector<16x8xbf16>
    %49 = vector.extract_strided_slice %46 {offsets = [0, 16], sizes = [16, 8], strides = [1, 1]} : vector<16x32xbf16> to vector<16x8xbf16>
    %50 = vector.extract_strided_slice %46 {offsets = [0, 24], sizes = [16, 8], strides = [1, 1]} : vector<16x32xbf16> to vector<16x8xbf16>
    %51 = vector.shape_cast %47 : vector<16x8xbf16> to vector<1x16x8xbf16>
    %52 = vector.shape_cast %48 : vector<16x8xbf16> to vector<1x16x8xbf16>
    %53 = vector.shape_cast %49 : vector<16x8xbf16> to vector<1x16x8xbf16>
    %54 = vector.shape_cast %50 : vector<16x8xbf16> to vector<1x16x8xbf16>
    %55 = tpu.concatenate %51, %52, %53, %54 in 0 : vector<1x16x8xbf16>, vector<1x16x8xbf16>, vector<1x16x8xbf16>, vector<1x16x8xbf16> -> vector<4x16x8xbf16>
    %56 = vector.shape_cast %55 : vector<4x16x8xbf16> to vector<8x8x8xbf16>
    %57 = vector.extract_strided_slice %34 {offsets = [0, 64], sizes = [16, 32], strides = [1, 1]} : vector<16x96xbf16> to vector<16x32xbf16>
    %58 = vector.extract_strided_slice %57 {offsets = [0, 0], sizes = [16, 8], strides = [1, 1]} : vector<16x32xbf16> to vector<16x8xbf16>
    %59 = vector.extract_strided_slice %57 {offsets = [0, 8], sizes = [16, 8], strides = [1, 1]} : vector<16x32xbf16> to vector<16x8xbf16>
    %60 = vector.extract_strided_slice %57 {offsets = [0, 16], sizes = [16, 8], strides = [1, 1]} : vector<16x32xbf16> to vector<16x8xbf16>
    %61 = vector.extract_strided_slice %57 {offsets = [0, 24], sizes = [16, 8], strides = [1, 1]} : vector<16x32xbf16> to vector<16x8xbf16>
    %62 = vector.shape_cast %58 : vector<16x8xbf16> to vector<1x16x8xbf16>
    %63 = vector.shape_cast %59 : vector<16x8xbf16> to vector<1x16x8xbf16>
    %64 = vector.shape_cast %60 : vector<16x8xbf16> to vector<1x16x8xbf16>
    %65 = vector.shape_cast %61 : vector<16x8xbf16> to vector<1x16x8xbf16>
    %66 = tpu.concatenate %62, %63, %64, %65 in 0 : vector<1x16x8xbf16>, vector<1x16x8xbf16>, vector<1x16x8xbf16>, vector<1x16x8xbf16> -> vector<4x16x8xbf16>
    %67 = vector.shape_cast %66 : vector<4x16x8xbf16> to vector<8x8x8xbf16>
    "tpu.trace_start"() <{level = 10 : i32, message = "bnd,bmd->bnm"}> : () -> ()
    %cst_13 = arith.constant dense<0.000000e+00> : vector<8x8x8xf32>
    %68 = tpu.matmul %45, %56, %cst_13 {dimension_numbers = #tpu.dot_dimension_numbers<[2], [2], [1], [1], [0, 0, 0, 1, 1, 1], [0], [0]>} : vector<8x8x8xbf16>, vector<8x8x8xbf16>, vector<8x8x8xf32> -> vector<8x8x8xf32>
    "tpu.trace_stop"() : () -> ()
    %cst_14 = arith.constant dense<0xFF800000> : vector<8x8xf32>
    %69 = vector.multi_reduction <maximumf>, %68, %cst_14 [2] : vector<8x8x8xf32> to vector<8x8xf32>
    %70 = vector.shape_cast %69 : vector<8x8xf32> to vector<8x8x1xf32>
    %71 = vector.broadcast %70 : vector<8x8x1xf32> to vector<8x8x8xf32>
    %72 = arith.subf %68, %71 : vector<8x8x8xf32>
    %73 = math.exp %72 : vector<8x8x8xf32>
    %cst_15 = arith.constant dense<0.000000e+00> : vector<8x8xf32>
    %74 = vector.multi_reduction <add>, %73, %cst_15 [2] : vector<8x8x8xf32> to vector<8x8xf32>
    %75 = vector.shape_cast %74 : vector<8x8xf32> to vector<8x8x1xf32>
    %76 = tpu.reciprocal %75 {approx = true} : vector<8x8x1xf32> -> vector<8x8x1xf32>
    %77 = vector.broadcast %76 : vector<8x8x1xf32> to vector<8x8x8xf32>
    %78 = arith.mulf %73, %77 : vector<8x8x8xf32>
    %79 = arith.truncf %78 : vector<8x8x8xf32> to vector<8x8x8xbf16>
    "tpu.trace_start"() <{level = 10 : i32, message = "bnm,bmd->bnd"}> : () -> ()
    %cst_16 = arith.constant dense<0.000000e+00> : vector<8x8x8xf32>
    %80 = tpu.matmul %79, %67, %cst_16 {dimension_numbers = #tpu.dot_dimension_numbers<[2], [1], [1], [2], [0, 0, 0, 1, 1, 2], [0], [0]>} : vector<8x8x8xbf16>, vector<8x8x8xbf16>, vector<8x8x8xf32> -> vector<8x8x8xf32>
    "tpu.trace_stop"() : () -> ()
    %81 = arith.truncf %80 : vector<8x8x8xf32> to vector<8x8x8xbf16>
    %82 = vector.shape_cast %81 : vector<8x8x8xbf16> to vector<4x16x8xbf16>
    %83 = vector.extract_strided_slice %82 {offsets = [0, 0, 0], sizes = [1, 16, 8], strides = [1, 1, 1]} : vector<4x16x8xbf16> to vector<1x16x8xbf16>
    %84 = vector.shape_cast %83 : vector<1x16x8xbf16> to vector<16x8xbf16>
    %85 = vector.extract_strided_slice %82 {offsets = [1, 0, 0], sizes = [1, 16, 8], strides = [1, 1, 1]} : vector<4x16x8xbf16> to vector<1x16x8xbf16>
    %86 = vector.shape_cast %85 : vector<1x16x8xbf16> to vector<16x8xbf16>
    %87 = vector.extract_strided_slice %82 {offsets = [2, 0, 0], sizes = [1, 16, 8], strides = [1, 1, 1]} : vector<4x16x8xbf16> to vector<1x16x8xbf16>
    %88 = vector.shape_cast %87 : vector<1x16x8xbf16> to vector<16x8xbf16>
    %89 = vector.extract_strided_slice %82 {offsets = [3, 0, 0], sizes = [1, 16, 8], strides = [1, 1, 1]} : vector<4x16x8xbf16> to vector<1x16x8xbf16>
    %90 = vector.shape_cast %89 : vector<1x16x8xbf16> to vector<16x8xbf16>
    %91 = tpu.concatenate %84, %86, %88, %90 in 1 : vector<16x8xbf16>, vector<16x8xbf16>, vector<16x8xbf16>, vector<16x8xbf16> -> vector<16x32xbf16>
    %c0_17 = arith.constant 0 : index
    %c0_18 = arith.constant 0 : index
    %c0_19 = arith.constant 0 : index
    %92 = vector.load %arg4[%c0_17, %c0_18, %c0_19] : memref<1x32x32xbf16, #tpu.memory_space<vmem>>, vector<1x32x32xbf16>
    %93 = vector.shape_cast %92 : vector<1x32x32xbf16> to vector<32x32xbf16>
    %cst_20 = arith.constant dense<0.000000e+00> : vector<16x32xf32>
    %94 = tpu.matmul %91, %93, %cst_20 {dimension_numbers = #tpu.dot_dimension_numbers<[1], [0], [0], [1], [0, 0, 1, 1], [], []>} : vector<16x32xbf16>, vector<32x32xbf16>, vector<16x32xf32> -> vector<16x32xf32>
    %95 = vector.extract_strided_slice %5 {offsets = [2, 0], sizes = [1, 32], strides = [1, 1]} : vector<6x32xf32> to vector<1x32xf32>
    %96 = vector.broadcast %95 : vector<1x32xf32> to vector<16x32xf32>
    %97 = arith.addf %94, %96 : vector<16x32xf32>
    %98 = arith.addf %97, %3 : vector<16x32xf32>
    %99 = vector.extract_strided_slice %5 {offsets = [3, 0], sizes = [1, 32], strides = [1, 1]} : vector<6x32xf32> to vector<1x32xf32>
    %100 = vector.extract_strided_slice %5 {offsets = [4, 0], sizes = [1, 32], strides = [1, 1]} : vector<6x32xf32> to vector<1x32xf32>
    %cst_21 = arith.constant dense<0.000000e+00> : vector<16xf32>
    %101 = vector.multi_reduction <add>, %98, %cst_21 [1] : vector<16x32xf32> to vector<16xf32>
    %102 = vector.shape_cast %101 : vector<16xf32> to vector<16x1xf32>
    %cst_22 = arith.constant 3.200000e+01 : f32
    %103 = vector.broadcast %cst_22 : f32 to vector<16x1xf32>
    %104 = arith.divf %102, %103 : vector<16x1xf32>
    %105 = vector.broadcast %104 : vector<16x1xf32> to vector<16x32xf32>
    %106 = arith.subf %98, %105 : vector<16x32xf32>
    %107 = arith.mulf %106, %106 : vector<16x32xf32>
    %cst_23 = arith.constant dense<0.000000e+00> : vector<16xf32>
    %108 = vector.multi_reduction <add>, %107, %cst_23 [1] : vector<16x32xf32> to vector<16xf32>
    %109 = vector.shape_cast %108 : vector<16xf32> to vector<16x1xf32>
    %cst_24 = arith.constant 3.200000e+01 : f32
    %110 = vector.broadcast %cst_24 : f32 to vector<16x1xf32>
    %111 = arith.divf %109, %110 : vector<16x1xf32>
    %112 = vector.broadcast %104 : vector<16x1xf32> to vector<16x32xf32>
    %113 = arith.subf %98, %112 : vector<16x32xf32>
    %cst_25 = arith.constant 9.99999974E-6 : f32
    %114 = vector.broadcast %cst_25 : f32 to vector<16x1xf32>
    %115 = arith.addf %111, %114 : vector<16x1xf32>
    %116 = math.rsqrt %115 : vector<16x1xf32>
    %117 = vector.broadcast %116 : vector<16x1xf32> to vector<16x32xf32>
    %118 = arith.mulf %113, %117 : vector<16x32xf32>
    %119 = vector.broadcast %99 : vector<1x32xf32> to vector<16x32xf32>
    %120 = arith.mulf %118, %119 : vector<16x32xf32>
    %121 = vector.broadcast %100 : vector<1x32xf32> to vector<16x32xf32>
    %122 = arith.addf %120, %121 : vector<16x32xf32>
    %123 = arith.truncf %122 : vector<16x32xf32> to vector<16x32xbf16>
    %c0_26 = arith.constant 0 : index
    %c0_27 = arith.constant 0 : index
    %c0_28 = arith.constant 0 : index
    %124 = vector.load %arg5[%c0_26, %c0_27, %c0_28] : memref<1x32x64xbf16, #tpu.memory_space<vmem>>, vector<1x32x64xbf16>
    %125 = vector.shape_cast %124 : vector<1x32x64xbf16> to vector<32x64xbf16>
    %cst_29 = arith.constant dense<0.000000e+00> : vector<16x64xf32>
    %126 = tpu.matmul %123, %125, %cst_29 {dimension_numbers = #tpu.dot_dimension_numbers<[1], [0], [0], [1], [0, 0, 1, 1], [], []>} : vector<16x32xbf16>, vector<32x64xbf16>, vector<16x64xf32> -> vector<16x64xf32>
    %c0_30 = arith.constant 0 : index
    %c0_31 = arith.constant 0 : index
    %c0_32 = arith.constant 0 : index
    %127 = vector.load %arg8[%c0_30, %c0_31, %c0_32] : memref<1x1x64xf32, #tpu.memory_space<vmem>>, vector<1x1x64xf32>
    %128 = vector.shape_cast %127 : vector<1x1x64xf32> to vector<1x64xf32>
    %129 = vector.broadcast %128 : vector<1x64xf32> to vector<16x64xf32>
    %130 = arith.addf %126, %129 : vector<16x64xf32>
    %cst_33 = arith.constant 0.707106769 : f32
    %131 = vector.broadcast %cst_33 : f32 to vector<16x64xf32>
    %132 = arith.mulf %130, %131 : vector<16x64xf32>
    %133 = math.absf %132 : vector<16x64xf32>
    %cst_34 = arith.constant 0.327591091 : f32
    %134 = vector.broadcast %cst_34 : f32 to vector<16x64xf32>
    %135 = arith.mulf %134, %133 : vector<16x64xf32>
    %cst_35 = arith.constant 1.000000e+00 : f32
    %136 = vector.broadcast %cst_35 : f32 to vector<16x64xf32>
    %137 = arith.addf %136, %135 : vector<16x64xf32>
    %cst_36 = arith.constant 1.000000e+00 : f32
    %138 = vector.broadcast %cst_36 : f32 to vector<16x64xf32>
    %139 = arith.divf %138, %137 : vector<16x64xf32>
    %cst_37 = arith.constant 1.06140542 : f32
    %140 = vector.broadcast %cst_37 : f32 to vector<16x64xf32>
    %141 = arith.mulf %140, %139 : vector<16x64xf32>
    %cst_38 = arith.constant -1.45315206 : f32
    %142 = vector.broadcast %cst_38 : f32 to vector<16x64xf32>
    %143 = arith.addf %141, %142 : vector<16x64xf32>
    %144 = arith.mulf %143, %139 : vector<16x64xf32>
    %cst_39 = arith.constant 1.42141378 : f32
    %145 = vector.broadcast %cst_39 : f32 to vector<16x64xf32>
    %146 = arith.addf %144, %145 : vector<16x64xf32>
    %147 = arith.mulf %146, %139 : vector<16x64xf32>
    %cst_40 = arith.constant -0.284496725 : f32
    %148 = vector.broadcast %cst_40 : f32 to vector<16x64xf32>
    %149 = arith.addf %147, %148 : vector<16x64xf32>
    %150 = arith.mulf %149, %139 : vector<16x64xf32>
    %cst_41 = arith.constant 0.254829586 : f32
    %151 = vector.broadcast %cst_41 : f32 to vector<16x64xf32>
    %152 = arith.addf %150, %151 : vector<16x64xf32>
    %153 = arith.mulf %152, %139 : vector<16x64xf32>
    %cst_42 = arith.constant 0.000000e+00 : f32
    %154 = vector.broadcast %cst_42 : f32 to vector<16x64xf32>
    %155 = arith.subf %154, %133 : vector<16x64xf32>
    %156 = arith.mulf %155, %133 : vector<16x64xf32>
    %157 = math.exp %156 : vector<16x64xf32>
    %158 = arith.mulf %153, %157 : vector<16x64xf32>
    %cst_43 = arith.constant 1.000000e+00 : f32
    %159 = vector.broadcast %cst_43 : f32 to vector<16x64xf32>
    %160 = arith.subf %159, %158 : vector<16x64xf32>
    %cst_44 = arith.constant 0.000000e+00 : f32
    %161 = vector.broadcast %cst_44 : f32 to vector<16x64xf32>
    %162 = arith.cmpf oge, %132, %161 : vector<16x64xf32>
    %cst_45 = arith.constant 0.000000e+00 : f32
    %163 = vector.broadcast %cst_45 : f32 to vector<16x64xf32>
    %164 = arith.subf %163, %160 : vector<16x64xf32>
    %165 = arith.select %162, %160, %164 : vector<16x64xi1>, vector<16x64xf32>
    %cst_46 = arith.constant 5.000000e-01 : f32
    %166 = vector.broadcast %cst_46 : f32 to vector<16x64xf32>
    %167 = arith.mulf %166, %130 : vector<16x64xf32>
    %cst_47 = arith.constant 1.000000e+00 : f32
    %168 = vector.broadcast %cst_47 : f32 to vector<16x64xf32>
    %169 = arith.addf %168, %165 : vector<16x64xf32>
    %170 = arith.mulf %167, %169 : vector<16x64xf32>
    %171 = arith.truncf %170 : vector<16x64xf32> to vector<16x64xbf16>
    %c0_48 = arith.constant 0 : index
    %c0_49 = arith.constant 0 : index
    %c0_50 = arith.constant 0 : index
    %172 = vector.load %arg6[%c0_48, %c0_49, %c0_50] : memref<1x64x32xbf16, #tpu.memory_space<vmem>>, vector<1x64x32xbf16>
    %173 = vector.shape_cast %172 : vector<1x64x32xbf16> to vector<64x32xbf16>
    %cst_51 = arith.constant dense<0.000000e+00> : vector<16x32xf32>
    %174 = tpu.matmul %171, %173, %cst_51 {dimension_numbers = #tpu.dot_dimension_numbers<[1], [0], [0], [1], [0, 0, 1, 1], [], []>} : vector<16x64xbf16>, vector<64x32xbf16>, vector<16x32xf32> -> vector<16x32xf32>
    %175 = vector.extract_strided_slice %5 {offsets = [5, 0], sizes = [1, 32], strides = [1, 1]} : vector<6x32xf32> to vector<1x32xf32>
    %176 = vector.broadcast %175 : vector<1x32xf32> to vector<16x32xf32>
    %177 = arith.addf %174, %176 : vector<16x32xf32>
    %178 = arith.addf %177, %98 : vector<16x32xf32>
    %c0_52 = arith.constant 0 : index
    %c0_53 = arith.constant 0 : index
    %179 = vector.load %arg11[%c0_52, %c0_53] : memref<16x32xf32, #tpu.memory_space<vmem>>, vector<16x32xf32>
    tpu.vector_store %arg11[%c0_52, %c0_53], %178 {strides = array<i32>} : memref<16x32xf32, #tpu.memory_space<vmem>>, vector<16x32xf32>,
    %c1_i32 = arith.constant 1 : i32
    %180 = arith.cmpi eq, %arg1, %c1_i32 : i32
    %181 = arith.extui %180 : i1 to i32
    %c0_i32_54 = arith.constant 0 : i32
    %182 = arith.cmpi ne, %181, %c0_i32_54 : i32
    scf.if %182 {
      %c0_55 = arith.constant 0 : index
      %c0_56 = arith.constant 0 : index
      %183 = vector.load %arg9[%c0_55, %c0_56] : memref<2x32xf32, #tpu.memory_space<vmem>>, vector<2x32xf32>
      %184 = vector.extract_strided_slice %183 {offsets = [0, 0], sizes = [1, 32], strides = [1, 1]} : vector<2x32xf32> to vector<1x32xf32>
      %185 = vector.extract_strided_slice %183 {offsets = [1, 0], sizes = [1, 32], strides = [1, 1]} : vector<2x32xf32> to vector<1x32xf32>
      %cst_57 = arith.constant dense<0.000000e+00> : vector<16xf32>
      %186 = vector.multi_reduction <add>, %178, %cst_57 [1] : vector<16x32xf32> to vector<16xf32>
      %187 = vector.shape_cast %186 : vector<16xf32> to vector<16x1xf32>
      %cst_58 = arith.constant 3.200000e+01 : f32
      %188 = vector.broadcast %cst_58 : f32 to vector<16x1xf32>
      %189 = arith.divf %187, %188 : vector<16x1xf32>
      %190 = vector.broadcast %189 : vector<16x1xf32> to vector<16x32xf32>
      %191 = arith.subf %178, %190 : vector<16x32xf32>
      %192 = arith.mulf %191, %191 : vector<16x32xf32>
      %cst_59 = arith.constant dense<0.000000e+00> : vector<16xf32>
      %193 = vector.multi_reduction <add>, %192, %cst_59 [1] : vector<16x32xf32> to vector<16xf32>
      %194 = vector.shape_cast %193 : vector<16xf32> to vector<16x1xf32>
      %cst_60 = arith.constant 3.200000e+01 : f32
      %195 = vector.broadcast %cst_60 : f32 to vector<16x1xf32>
      %196 = arith.divf %194, %195 : vector<16x1xf32>
      %197 = vector.broadcast %189 : vector<16x1xf32> to vector<16x32xf32>
      %198 = arith.subf %178, %197 : vector<16x32xf32>
      %cst_61 = arith.constant 9.99999974E-6 : f32
      %199 = vector.broadcast %cst_61 : f32 to vector<16x1xf32>
      %200 = arith.addf %196, %199 : vector<16x1xf32>
      %201 = math.rsqrt %200 : vector<16x1xf32>
      %202 = vector.broadcast %201 : vector<16x1xf32> to vector<16x32xf32>
      %203 = arith.mulf %198, %202 : vector<16x32xf32>
      %204 = vector.broadcast %184 : vector<1x32xf32> to vector<16x32xf32>
      %205 = arith.mulf %203, %204 : vector<16x32xf32>
      %206 = vector.broadcast %185 : vector<1x32xf32> to vector<16x32xf32>
      %207 = arith.addf %205, %206 : vector<16x32xf32>
      %208 = vector.shape_cast %207 : vector<16x32xf32> to vector<2x8x32xf32>
      %c0_62 = arith.constant 0 : index
      %c0_63 = arith.constant 0 : index
      %c0_64 = arith.constant 0 : index
      %209 = vector.load %arg10[%c0_62, %c0_63, %c0_64] : memref<2x8x32xf32, #tpu.memory_space<vmem>>, vector<2x8x32xf32>
      tpu.vector_store %arg10[%c0_62, %c0_63, %c0_64], %208 {strides = array<i32>} : memref<2x8x32xf32, #tpu.memory_space<vmem>>, vector<2x8x32xf32>,
    } else {
    }
    return
  }
  func.func @transform_0(%arg0: i32, %arg1: i32) -> (i32, i32, i32) {
    %c0_i32 = arith.constant 0 : i32
    %c0_i32_0 = arith.constant 0 : i32
    %c0_i32_1 = arith.constant 0 : i32
    return %arg0, %c0_i32, %c0_i32_0 : i32, i32, i32
  }
  func.func @transform_1(%arg0: i32, %arg1: i32) -> (i32, i32, i32) {
    %c0_i32 = arith.constant 0 : i32
    %c0_i32_0 = arith.constant 0 : i32
    %c0_i32_1 = arith.constant 0 : i32
    return %arg1, %c0_i32, %c0_i32_0 : i32, i32, i32
  }
  func.func @transform_2(%arg0: i32, %arg1: i32) -> (i32, i32, i32) {
    %c0_i32 = arith.constant 0 : i32
    %c0_i32_0 = arith.constant 0 : i32
    %c0_i32_1 = arith.constant 0 : i32
    return %arg1, %c0_i32, %c0_i32_0 : i32, i32, i32
  }
  func.func @transform_3(%arg0: i32, %arg1: i32) -> (i32, i32, i32) {
    %c0_i32 = arith.constant 0 : i32
    %c0_i32_0 = arith.constant 0 : i32
    %c0_i32_1 = arith.constant 0 : i32
    return %arg1, %c0_i32, %c0_i32_0 : i32, i32, i32
  }
  func.func @transform_4(%arg0: i32, %arg1: i32) -> (i32, i32, i32) {
    %c0_i32 = arith.constant 0 : i32
    %c0_i32_0 = arith.constant 0 : i32
    %c0_i32_1 = arith.constant 0 : i32
    return %arg1, %c0_i32, %c0_i32_0 : i32, i32, i32
  }
  func.func @transform_5(%arg0: i32, %arg1: i32) -> (i32, i32, i32) {
    %c0_i32 = arith.constant 0 : i32
    %c0_i32_0 = arith.constant 0 : i32
    %c0_i32_1 = arith.constant 0 : i32
    return %arg1, %c0_i32, %c0_i32_0 : i32, i32, i32
  }
  func.func @transform_6(%arg0: i32, %arg1: i32) -> (i32, i32, i32) {
    %c0_i32 = arith.constant 0 : i32
    %c0_i32_0 = arith.constant 0 : i32
    %c0_i32_1 = arith.constant 0 : i32
    return %arg1, %c0_i32, %c0_i32_0 : i32, i32, i32
  }
  func.func @transform_7(%arg0: i32, %arg1: i32) -> (i32, i32) {
    %c0_i32 = arith.constant 0 : i32
    %c0_i32_0 = arith.constant 0 : i32
    %c0_i32_1 = arith.constant 0 : i32
    return %c0_i32, %c0_i32_0 : i32, i32
  }
  func.func @transform_8(%arg0: i32, %arg1: i32) -> (i32, i32, i32) {
    %c0_i32 = arith.constant 0 : i32
    %c0_i32_0 = arith.constant 0 : i32
    %c0_i32_1 = arith.constant 0 : i32
    return %arg0, %c0_i32, %c0_i32_0 : i32, i32, i32
  }
}

</mosaic_0001>

<llo_original>
// kernel: tpu_custom_call.1
$region0: #{tpu_custom_call.1}
  #allocation0 [shape = 'u32[]', space=smem, size = 0x4, offset = 0x4, fixed_abs, tag = 'smem constant byte address 0x4 - core index']
  #allocation1 [shape = 'u32[72,128]{1,0:T(1,128)}', space=vmem, size = 0x9000, scoped, tag = 'internal scratch']
  #allocation2 [shape = 'f32[16,32]{1,0:T(8,128)}', space=vmem, size = 0x2000, scoped, tag = 'scratch operand']
  %s0 = inlined_call_operand.vmem [shape: f32[4,8,32], index: 0, kind: input, shape index: {}]
  %s1 = inlined_call_operand.vmem [shape: bf16[2,32,96], index: 1, kind: input, shape index: {}]
  %s2 = inlined_call_operand.vmem [shape: bf16[2,32,32], index: 2, kind: input, shape index: {}]
  %s3 = inlined_call_operand.hbm [shape: bf16[2,32,64], index: 3, kind: input, shape index: {}]
  %s4 = inlined_call_operand.vmem [shape: bf16[2,64,32], index: 4, kind: input, shape index: {}]
  %s5 = inlined_call_operand.vmem [shape: f32[2,6,32], index: 5, kind: input, shape index: {}]
  %s6 = inlined_call_operand.vmem [shape: f32[2,1,64], index: 6, kind: input, shape index: {}]
  %s7 = inlined_call_operand.vmem [shape: f32[2,32], index: 7, kind: input, shape index: {}]
  %s8 = inlined_call_operand.hbm [shape: f32[4,8,32], index: 8, kind: output, shape index: {}]
  %s9 = sld [smem:[#allocation0]]
  $region77: #{tpu_custom_call.1} parent=0
    _
  %s11 = ssub.s32 1, %s9
  %s12 = scalar_select 0, %s11, %s9
  $region1: #{tpu_custom_call.1} parent=0
    #allocation3 [shape = 'u8[16384]{0}', space=vmem, size = 0x4000, scoped, tag = 'input window, operand 3']
    #allocation4 [shape = 's32[2]{0}', space=sflag, size = 0x8, scoped, tag = 'scoped memory for tpu_custom_call.1']
    #allocation5 [shape = 's32[2]{0}', space=sflag, size = 0x8, scoped, tag = 'scoped memory for tpu_custom_call.1']
    #allocation6 [shape = 'u8[16384]{0}', space=vmem, size = 0x4000, scoped, tag = 'output window, operand 0']
    %13 = vsyncpa [#allocation4], 0
    %s14 = scalar_lea.sflag [#allocation4], 1
    %15 = vsyncpa %s14, 0
    %16 = vsyncpa [#allocation5], 0
    %s17 = scalar_lea.sflag [#allocation5], 1
    %18 = vsyncpa %s17, 0
    loop: start=0, step=1, limit=6
    $region2: #{tpu_custom_call.1} parent=1 // loop_pre_header
      _
    $region3: #{tpu_custom_call.1} parent=1 // loop_header
      %s20 = sphi 0, %s24
      %p21 = scmp.ge.s32.totalorder %s20, 6
      %s27 = sphi 0, %s39
      %s28 = sphi 0, %s35
      %s29 = sphi 0, %s27
      %s30 = sphi 0, %s28
      %s31 = sphi 0, %s29
      %s32 = sphi 0, %s30
      %s42 = sphi 0, %s44
      %s45 = sphi 0, %s42
      %s46 = sphi 0, %s45
      %s62 = sphi 0, %s46
      %s68 = sphi 0, %s70
      %s71 = sphi 0, %s68
      %s72 = sphi 0, %s71
      %s88 = sphi 0, %s72
      %s94 = sphi 0, %s96
      %s97 = sphi 0, %s94
      %s98 = sphi 0, %s97
      %s114 = sphi 0, %s98
      %s120 = sphi 0, %s122
      %s123 = sphi 0, %s120
      %s124 = sphi 0, %s123
      %s140 = sphi 0, %s124
      %s146 = sphi 0, %s148
      %s149 = sphi 0, %s146
      %s150 = sphi 0, %s149
      %s166 = sphi 0, %s150
      %s172 = sphi 0, %s174
      %s175 = sphi 0, %s172
      %s176 = sphi 0, %s175
      %s192 = sphi 0, %s176
      %s198 = sphi 0, %s200
      %s201 = sphi 0, %s198
      %s202 = sphi 0, %s201
      %s218 = sphi 0, %s202
      %s222 = sphi 0, %s222
      %s224 = sphi 0, %s222
      %s225 = sphi 0, %s224
      %s239 = sphi 0, %s225
      %s245 = sphi 0, %s247
      %s248 = sphi 0, %s245
      %s249 = sphi 0, %s248
      %s265 = sphi 0, %s249
    $region4: #{tpu_custom_call.1} parent=1 // loop_header_branch
      %23 = sbr.rel (%p21) target = $region8
    $region5: #{tpu_custom_call.1} parent=1 // loop_body
      %s25 = ssub.s32 %s20, 1
      %s26 = ssub.s32 %s20, 2
      %s33 = sadd.s32 1, %s28
      %p34 = scmp.ge.s32.totalorder %s33, 2
      %s35 = scalar_select %p34, 0, %s33
      %s36 = sadd.s32 1, %s27
      %s37 = scalar_select %p34, %s36, %s27
      %p38 = scmp.ge.s32.totalorder %s37, 2
      %s39 = scalar_select %p38, 0, %s37
      %s40 = ssub.s32 %s27, %s39
      %p41 = scmp.eq.s32.totalorder %s40, 0
      %s43 = sadd.s32 %s42, 1
      %s44 = scalar_select %p41, %s42, %s43
      %p47 = pneg %p41
      %p48 = scmp.eq.s32.totalorder %s20, 3
      %p49 = por %p47, %p48
      %p50 = scmp.ne.s32.totalorder %s42, %s45
      %p51 = scmp.eq.s32.totalorder %s20, 0
      %p52 = por %p50, %p51
      %p53 = scmp.ne.s32.totalorder %s42, %s45
      %p54 = scmp.eq.s32.totalorder %s25, 3
      %p55 = por %p53, %p54
      %p56 = scmp.ne.s32.totalorder %s45, %s46
      %p57 = scmp.eq.s32.totalorder %s25, 0
      %p58 = por %p56, %p57
      %p59 = scmp.ne.s32.totalorder %s45, %s46
      %p60 = scmp.eq.s32.totalorder %s26, 3
      %p61 = por %p59, %p60
      %p63 = scmp.ne.s32.totalorder %s46, %s62
      %p64 = scmp.eq.s32.totalorder %s26, 0
      %p65 = por %p63, %p64
      %s66 = ssub.s32 %s28, %s35
      %p67 = scmp.eq.s32.totalorder %s66, 0
      %s69 = sadd.s32 %s68, 1
      %s70 = scalar_select %p67, %s68, %s69
      %p73 = pneg %p67
      %p74 = scmp.eq.s32.totalorder %s20, 3
      %p75 = por %p73, %p74
      %p76 = scmp.ne.s32.totalorder %s68, %s71
      %p77 = scmp.eq.s32.totalorder %s20, 0
      %p78 = por %p76, %p77
      %p79 = scmp.ne.s32.totalorder %s68, %s71
      %p80 = scmp.eq.s32.totalorder %s25, 3
      %p81 = por %p79, %p80
      %p82 = scmp.ne.s32.totalorder %s71, %s72
      %p83 = scmp.eq.s32.totalorder %s25, 0
      %p84 = por %p82, %p83
      %p85 = scmp.ne.s32.totalorder %s71, %s72
      %p86 = scmp.eq.s32.totalorder %s26, 3
      %p87 = por %p85, %p86
      %p89 = scmp.ne.s32.totalorder %s72, %s88
      %p90 = scmp.eq.s32.totalorder %s26, 0
      %p91 = por %p89, %p90
      %s92 = ssub.s32 %s28, %s35
      %p93 = scmp.eq.s32.totalorder %s92, 0
      %s95 = sadd.s32 %s94, 1
      %s96 = scalar_select %p93, %s94, %s95
      %p99 = pneg %p93
      %p100 = scmp.eq.s32.totalorder %s20, 3
      %p101 = por %p99, %p100
      %p102 = scmp.ne.s32.totalorder %s94, %s97
      %p103 = scmp.eq.s32.totalorder %s20, 0
      %p104 = por %p102, %p103
      %p105 = scmp.ne.s32.totalorder %s94, %s97
      %p106 = scmp.eq.s32.totalorder %s25, 3
      %p107 = por %p105, %p106
      %p108 = scmp.ne.s32.totalorder %s97, %s98
      %p109 = scmp.eq.s32.totalorder %s25, 0
      %p110 = por %p108, %p109
      %p111 = scmp.ne.s32.totalorder %s97, %s98
      %p112 = scmp.eq.s32.totalorder %s26, 3
      %p113 = por %p111, %p112
      %p115 = scmp.ne.s32.totalorder %s98, %s114
      %p116 = scmp.eq.s32.totalorder %s26, 0
      %p117 = por %p115, %p116
      %s118 = ssub.s32 %s28, %s35
      %p119 = scmp.eq.s32.totalorder %s118, 0
      %s121 = sadd.s32 %s120, 1
      %s122 = scalar_select %p119, %s120, %s121
      %p125 = pneg %p119
      %p126 = scmp.eq.s32.totalorder %s20, 3
      %p127 = por %p125, %p126
      %p128 = scmp.ne.s32.totalorder %s120, %s123
      %p129 = scmp.eq.s32.totalorder %s20, 0
      %p130 = por %p128, %p129
      %p131 = scmp.ne.s32.totalorder %s120, %s123
      %p132 = scmp.eq.s32.totalorder %s25, 3
      %p133 = por %p131, %p132
      %p134 = scmp.ne.s32.totalorder %s123, %s124
      %p135 = scmp.eq.s32.totalorder %s25, 0
      %p136 = por %p134, %p135
      %p137 = scmp.ne.s32.totalorder %s123, %s124
      %p138 = scmp.eq.s32.totalorder %s26, 3
      %p139 = por %p137, %p138
      %p141 = scmp.ne.s32.totalorder %s124, %s140
      %p142 = scmp.eq.s32.totalorder %s26, 0
      %p143 = por %p141, %p142
      %s144 = ssub.s32 %s28, %s35
      %p145 = scmp.eq.s32.totalorder %s144, 0
      %s147 = sadd.s32 %s146, 1
      %s148 = scalar_select %p145, %s146, %s147
      %p151 = pneg %p145
      %p152 = scmp.eq.s32.totalorder %s20, 3
      %p153 = por %p151, %p152
      %p154 = scmp.ne.s32.totalorder %s146, %s149
      %p155 = scmp.eq.s32.totalorder %s20, 0
      %p156 = por %p154, %p155
      %p157 = scmp.ne.s32.totalorder %s146, %s149
      %p158 = scmp.eq.s32.totalorder %s25, 3
      %p159 = por %p157, %p158
      %p160 = scmp.ne.s32.totalorder %s149, %s150
      %p161 = scmp.eq.s32.totalorder %s25, 0
      %p162 = por %p160, %p161
      %p163 = scmp.ne.s32.totalorder %s149, %s150
      %p164 = scmp.eq.s32.totalorder %s26, 3
      %p165 = por %p163, %p164
      %p167 = scmp.ne.s32.totalorder %s150, %s166
      %p168 = scmp.eq.s32.totalorder %s26, 0
      %p169 = por %p167, %p168
      %s170 = ssub.s32 %s28, %s35
      %p171 = scmp.eq.s32.totalorder %s170, 0
      %s173 = sadd.s32 %s172, 1
      %s174 = scalar_select %p171, %s172, %s173
      %p177 = pneg %p171
      %p178 = scmp.eq.s32.totalorder %s20, 3
      %p179 = por %p177, %p178
      %p180 = scmp.ne.s32.totalorder %s172, %s175
      %p181 = scmp.eq.s32.totalorder %s20, 0
      %p182 = por %p180, %p181
      %p183 = scmp.ne.s32.totalorder %s172, %s175
      %p184 = scmp.eq.s32.totalorder %s25, 3
      %p185 = por %p183, %p184
      %p186 = scmp.ne.s32.totalorder %s175, %s176
      %p187 = scmp.eq.s32.totalorder %s25, 0
      %p188 = por %p186, %p187
      %p189 = scmp.ne.s32.totalorder %s175, %s176
      %p190 = scmp.eq.s32.totalorder %s26, 3
      %p191 = por %p189, %p190
      %p193 = scmp.ne.s32.totalorder %s176, %s192
      %p194 = scmp.eq.s32.totalorder %s26, 0
      %p195 = por %p193, %p194
      %s196 = ssub.s32 %s28, %s35
      %p197 = scmp.eq.s32.totalorder %s196, 0
      %s199 = sadd.s32 %s198, 1
      %s200 = scalar_select %p197, %s198, %s199
      %p203 = pneg %p197
      %p204 = scmp.eq.s32.totalorder %s20, 3
      %p205 = por %p203, %p204
      %p206 = scmp.ne.s32.totalorder %s198, %s201
      %p207 = scmp.eq.s32.totalorder %s20, 0
      %p208 = por %p206, %p207
      %p209 = scmp.ne.s32.totalorder %s198, %s201
      %p210 = scmp.eq.s32.totalorder %s25, 3
      %p211 = por %p209, %p210
      %p212 = scmp.ne.s32.totalorder %s201, %s202
      %p213 = scmp.eq.s32.totalorder %s25, 0
      %p214 = por %p212, %p213
      %p215 = scmp.ne.s32.totalorder %s201, %s202
      %p216 = scmp.eq.s32.totalorder %s26, 3
      %p217 = por %p215, %p216
      %p219 = scmp.ne.s32.totalorder %s202, %s218
      %p220 = scmp.eq.s32.totalorder %s26, 0
      %p221 = por %p219, %p220
      %s223 = sadd.s32 %s222, 1
      %p226 = scmp.eq.s32.totalorder %s20, 3
      %p227 = scmp.ne.s32.totalorder %s222, %s224
      %p228 = scmp.eq.s32.totalorder %s20, 0
      %p229 = por %p227, %p228
      %p230 = scmp.ne.s32.totalorder %s222, %s224
      %p231 = scmp.eq.s32.totalorder %s25, 3
      %p232 = por %p230, %p231
      %p233 = scmp.ne.s32.totalorder %s224, %s225
      %p234 = scmp.eq.s32.totalorder %s25, 0
      %p235 = por %p233, %p234
      %p236 = scmp.ne.s32.totalorder %s224, %s225
      %p237 = scmp.eq.s32.totalorder %s26, 3
      %p238 = por %p236, %p237
      %p240 = scmp.ne.s32.totalorder %s225, %s239
      %p241 = scmp.eq.s32.totalorder %s26, 0
      %p242 = por %p240, %p241
      %s243 = ssub.s32 %s27, %s39
      %p244 = scmp.eq.s32.totalorder %s243, 0
      %s246 = sadd.s32 %s245, 1
      %s247 = scalar_select %p244, %s245, %s246
      %p250 = pneg %p244
      %p251 = scmp.eq.s32.totalorder %s20, 3
      %p252 = por %p250, %p251
      %p253 = scmp.ne.s32.totalorder %s245, %s248
      %p254 = scmp.eq.s32.totalorder %s20, 0
      %p255 = por %p253, %p254
      %p256 = scmp.ne.s32.totalorder %s245, %s248
      %p257 = scmp.eq.s32.totalorder %s25, 3
      %p258 = por %p256, %p257
      %p259 = scmp.ne.s32.totalorder %s248, %s249
      %p260 = scmp.eq.s32.totalorder %s25, 0
      %p261 = por %p259, %p260
      %p262 = scmp.ne.s32.totalorder %s248, %s249
      %p263 = scmp.eq.s32.totalorder %s26, 3
      %p264 = por %p262, %p263
      %p266 = scmp.ne.s32.totalorder %s249, %s265
      %p267 = scmp.eq.s32.totalorder %s26, 0
      %p268 = por %p266, %p267
      %p269 = scmp.le.s32.totalorder 1, %s20
      %p270 = scmp.lt.s32.totalorder %s20, 5
      %p271 = pnand %p269, %p270
      %p272 = pneg %p271
      // Predicated region
      $region9: #{tpu_custom_call.1} parent=5 // pred_check
        _
      $region10: #{tpu_custom_call.1} parent=5 // pred_check_branch
        %274 = sbr.rel (%p271) target = $region12
      $region11: #{tpu_custom_call.1} parent=5 // pred_region
        %s275 = ssub.s32 %s20, 1
        // Predicated region
        $region13: #{tpu_custom_call.1} parent=11 // pred_check
          %p276 = pneg %p235
        $region14: #{tpu_custom_call.1} parent=11 // pred_check_branch
          %278 = sbr.rel (%p276) target = $region16
        $region15: #{tpu_custom_call.1} parent=11 // pred_region
          _
        $region16: #{tpu_custom_call.1} parent=11 // pred_fallthru
          _
      $region12: #{tpu_custom_call.1} parent=5 // pred_fallthru
        _
      %p279 = scmp.lt.s32.totalorder %s20, 4
      // Predicated region
      $region17: #{tpu_custom_call.1} parent=5 // pred_check
        %p280 = pneg %p279
      $region18: #{tpu_custom_call.1} parent=5 // pred_check_branch
        %282 = sbr.rel (%p280) target = $region20
      $region19: #{tpu_custom_call.1} parent=5 // pred_region
        // Predicated region
        $region21: #{tpu_custom_call.1} parent=19 // pred_check
          %p283 = pneg %p52
        $region22: #{tpu_custom_call.1} parent=19 // pred_check_branch
          %285 = sbr.rel (%p283) target = $region24
        $region23: #{tpu_custom_call.1} parent=19 // pred_region
          %s286 = smul.u32 2, %s27
          %p287 = scmp.lt.s32.totalorder %s286, 3
          %s288 = scalar_select %p287, %s286, 3
          %s289 = smul.addr %s288, 8
          %s290 = scalar_lea.vmem %s0, %s289
          %s291 = smul.u32 2, %s27
        $region24: #{tpu_custom_call.1} parent=19 // pred_fallthru
          _
        // Predicated region
        $region25: #{tpu_custom_call.1} parent=19 // pred_check
          %p292 = pneg %p78
        $region26: #{tpu_custom_call.1} parent=19 // pred_check_branch
          %294 = sbr.rel (%p292) target = $region28
        $region27: #{tpu_custom_call.1} parent=19 // pred_region
          %p295 = scmp.lt.s32.totalorder %s28, 1
          %s296 = scalar_select %p295, %s28, 1
          %s297 = smul.addr %s296, 4
          %s298 = smul.addr %s297, 4
          %s299 = scalar_lea.vmem %s1, %s298
        $region28: #{tpu_custom_call.1} parent=19 // pred_fallthru
          _
        // Predicated region
        $region29: #{tpu_custom_call.1} parent=19 // pred_check
          %p300 = pneg %p104
        $region30: #{tpu_custom_call.1} parent=19 // pred_check_branch
          %302 = sbr.rel (%p300) target = $region32
        $region31: #{tpu_custom_call.1} parent=19 // pred_region
          %p303 = scmp.lt.s32.totalorder %s28, 1
          %s304 = scalar_select %p303, %s28, 1
          %s305 = smul.addr %s304, 4
          %s306 = smul.addr %s305, 4
          %s307 = scalar_lea.vmem %s2, %s306
        $region32: #{tpu_custom_call.1} parent=19 // pred_fallthru
          _
        // Predicated region
        $region33: #{tpu_custom_call.1} parent=19 // pred_check
          %p308 = pneg %p130
        $region34: #{tpu_custom_call.1} parent=19 // pred_check_branch
          %310 = sbr.rel (%p308) target = $region36
        $region35: #{tpu_custom_call.1} parent=19 // pred_region
          %s311 = sand.u32 %s120, 1
          %s312 = scalar_lea.sflag [#allocation4], %s311
          %s313 = sand.u32 %s120, 1
          %s314 = smul.addr %s313, 16
          %s315 = scalar_lea.vmem [#allocation3], %s314
          %317 = vsyncadd %s312, 0
          %s318 = smul.addr %s28, 4
          %s319 = smul.addr %s318, 4
          %s320 = scalar_lea.hbm %s3, %s319
          %s321 = sshll.u32 %s320, 4
          %s322 = int_to_ptr.hbm [resolvable:$true] %s321
          %s323 = sshll.u32 %s315, 4
          %s324 = int_to_ptr.vmem [resolvable:$true] %s323
          %329 = dma.hbm_to_vmem [thread:$0]  %s322, 256, %s324, %s312, 64, 64, 4
        $region36: #{tpu_custom_call.1} parent=19 // pred_fallthru
          _
        // Predicated region
        $region37: #{tpu_custom_call.1} parent=19 // pred_check
          %p330 = pneg %p156
        $region38: #{tpu_custom_call.1} parent=19 // pred_check_branch
          %332 = sbr.rel (%p330) target = $region40
        $region39: #{tpu_custom_call.1} parent=19 // pred_region
          %p333 = scmp.lt.s32.totalorder %s28, 1
          %s334 = scalar_select %p333, %s28, 1
          %s335 = smul.addr %s334, 8
          %s336 = smul.addr %s335, 4
          %s337 = scalar_lea.vmem %s4, %s336
        $region40: #{tpu_custom_call.1} parent=19 // pred_fallthru
          _
        // Predicated region
        $region41: #{tpu_custom_call.1} parent=19 // pred_check
          %p338 = pneg %p182
        $region42: #{tpu_custom_call.1} parent=19 // pred_check_branch
          %340 = sbr.rel (%p338) target = $region44
        $region43: #{tpu_custom_call.1} parent=19 // pred_region
          %p341 = scmp.lt.s32.totalorder %s28, 1
          %s342 = scalar_select %p341, %s28, 1
          %s343 = smul.addr %s342, 8
          %s344 = scalar_lea.vmem %s5, %s343
        $region44: #{tpu_custom_call.1} parent=19 // pred_fallthru
          _
        // Predicated region
        $region45: #{tpu_custom_call.1} parent=19 // pred_check
          %p345 = pneg %p208
        $region46: #{tpu_custom_call.1} parent=19 // pred_check_branch
          %347 = sbr.rel (%p345) target = $region48
        $region47: #{tpu_custom_call.1} parent=19 // pred_region
          %p348 = scmp.lt.s32.totalorder %s28, 1
          %s349 = scalar_select %p348, %s28, 1
          %s350 = scalar_lea.vmem %s6, %s349
        $region48: #{tpu_custom_call.1} parent=19 // pred_fallthru
          _
      $region20: #{tpu_custom_call.1} parent=5 // pred_fallthru
        _
      %p351 = scmp.le.s32.totalorder 1, %s20
      %p352 = scmp.lt.s32.totalorder %s20, 5
      %p353 = pnand %p351, %p352
      %p354 = pneg %p353
      // Predicated region
      $region49: #{tpu_custom_call.1} parent=5 // pred_check
        _
      $region50: #{tpu_custom_call.1} parent=5 // pred_check_branch
        %356 = sbr.rel (%p353) target = $region52
      $region51: #{tpu_custom_call.1} parent=5 // pred_region
        %s357 = ssub.s32 %s20, 1
        %s358 = sand.u32 %s123, 1
        %s359 = scalar_lea.sflag [#allocation4], %s358
        %s360 = sand.u32 %s123, 1
        %s361 = smul.addr %s360, 16
        %s362 = scalar_lea.vmem [#allocation3], %s361
        // Predicated region
        $region53: #{tpu_custom_call.1} parent=51 // pred_check
          %p363 = pneg %p136
        $region54: #{tpu_custom_call.1} parent=51 // pred_check_branch
          %365 = sbr.rel (%p363) target = $region56
        $region55: #{tpu_custom_call.1} parent=51 // pred_region
          %367 = dma.done %s359, 256
        $region56: #{tpu_custom_call.1} parent=51 // pred_fallthru
          _
        %s368 = smul.u32 2, %s29
        %p369 = scmp.lt.s32.totalorder %s368, 3
        %s370 = scalar_select %p369, %s368, 3
        %s371 = smul.addr %s370, 8
        %s372 = scalar_lea.vmem %s0, %s371
        %p373 = pneg %p58
        %p374 = pneg %p55
        %p375 = scmp.lt.s32.totalorder %s30, 1
        %s376 = scalar_select %p375, %s30, 1
        %s377 = smul.addr %s376, 4
        %s378 = smul.addr %s377, 4
        %s379 = scalar_lea.vmem %s1, %s378
        %p380 = pneg %p84
        %p381 = pneg %p81
        %p382 = scmp.lt.s32.totalorder %s30, 1
        %s383 = scalar_select %p382, %s30, 1
        %s384 = smul.addr %s383, 4
        %s385 = smul.addr %s384, 4
        %s386 = scalar_lea.vmem %s2, %s385
        %p387 = pneg %p110
        %p388 = pneg %p107
        %s389 = sand.u32 %s123, 1
        %s390 = scalar_lea.sflag [#allocation4], %s389
        %s391 = sand.u32 %s123, 1
        %s392 = smul.addr %s391, 16
        %s393 = scalar_lea.vmem [#allocation3], %s392
        %p394 = pneg %p136
        %p395 = pneg %p133
        %p396 = scmp.lt.s32.totalorder %s30, 1
        %s397 = scalar_select %p396, %s30, 1
        %s398 = smul.addr %s397, 8
        %s399 = smul.addr %s398, 4
        %s400 = scalar_lea.vmem %s4, %s399
        %p401 = pneg %p162
        %p402 = pneg %p159
        %p403 = scmp.lt.s32.totalorder %s30, 1
        %s404 = scalar_select %p403, %s30, 1
        %s405 = smul.addr %s404, 8
        %s406 = scalar_lea.vmem %s5, %s405
        %p407 = pneg %p188
        %p408 = pneg %p185
        %p409 = scmp.lt.s32.totalorder %s30, 1
        %s410 = scalar_select %p409, %s30, 1
        %s411 = scalar_lea.vmem %s6, %s410
        %p412 = pneg %p214
        %p413 = pneg %p211
        %p414 = pneg %p235
        %p415 = pneg %p232
        %p416 = pneg %p261
        %p417 = pneg %p258
        %s418 = sand.u32 %s248, 1
        %s419 = scalar_lea.sflag [#allocation5], %s418
        %s420 = sand.u32 %s248, 1
        %s421 = smul.addr %s420, 16
        %s422 = scalar_lea.vmem [#allocation6], %s421
        %s423 = smul.u32 2, %s29
        %p424 = scmp.lt.s32.totalorder %s423, 3
        %s425 = scalar_select %p424, %s423, 3
        %s426 = smul.addr %s425, 8
        %s427 = scalar_lea.vmem %s0, %s426
        %s428 = smul.u32 2, %s29
        %p429 = scmp.lt.s32.totalorder %s30, 1
        %s430 = scalar_select %p429, %s30, 1
        %s431 = smul.addr %s430, 4
        %s432 = smul.addr %s431, 4
        %s433 = scalar_lea.vmem %s1, %s432
        %p434 = scmp.lt.s32.totalorder %s30, 1
        %s435 = scalar_select %p434, %s30, 1
        %s436 = smul.addr %s435, 4
        %s437 = smul.addr %s436, 4
        %s438 = scalar_lea.vmem %s2, %s437
        %p439 = scmp.lt.s32.totalorder %s30, 1
        %s440 = scalar_select %p439, %s30, 1
        %s441 = smul.addr %s440, 8
        %s442 = smul.addr %s441, 4
        %s443 = scalar_lea.vmem %s4, %s442
        %p444 = scmp.lt.s32.totalorder %s30, 1
        %s445 = scalar_select %p444, %s30, 1
        %s446 = smul.addr %s445, 8
        %s447 = scalar_lea.vmem %s5, %s446
        %p448 = scmp.lt.s32.totalorder %s30, 1
        %s449 = scalar_select %p448, %s30, 1
        %s450 = scalar_lea.vmem %s6, %s449
        %s451 = smul.u32 2, %s29
        %p453 = scmp.eq.s32.totalorder %s30, 0
        // Predicated region
        $region57: #{tpu_custom_call.1} parent=51 // pred_check
          %p454 = pneg %p453
        $region58: #{tpu_custom_call.1} parent=51 // pred_check_branch
          %456 = sbr.rel (%p454) target = $region60
        $region59: #{tpu_custom_call.1} parent=51 // pred_region
          %v457 = vld [vmem:[%s427] sm:$0xff]
          %v458 = vld [vmem:[%s427 + $0x8] sm:$0xff]
          %vm459 = vcmask 261120
          %460 = vst.msk [vmem:[#allocation2] sm:$0xff] %vm459, %v457
          %461 = vst.msk [vmem:[#allocation2 + $0x8] sm:$0xff] %vm459, %v458
        $region60: #{tpu_custom_call.1} parent=51 // pred_fallthru
          _
        %v462 = vld [vmem:[#allocation2] sm:$0xff]
        %v463 = vld [vmem:[#allocation2 + $0x8] sm:$0xff]
        %v464 = vld [vmem:[%s447] sm:$0x3f]
        %vm465 = vcmask 261120
        %v466 = vsel %vm465, %v462, 0.0
        %467 = vadd.xlane.f32.xlu0 %v466
        %v468 = vpop.xlane.xlu0 %467
        %v469 = vsel %vm465, %v463, 0.0
        %470 = vadd.xlane.f32.xlu0 %v469
        %v471 = vpop.xlane.xlu0 %470
        %v472 = vrcp.pop 32.0
        %v473 = vmul.f32 32.0, %v472
        %v474 = vsub.f32 1.0, %v473
        %v475 = vmul.f32 %v472, %v474
        %v476 = vadd.f32 %v472, %v475
        %vm477 = vweird.f32 %v472
        %v478 = vsel %vm477, %v472, %v476
        %v479 = vmul.f32 %v468, %v478
        %v480 = vmul.f32 %v471, %v478
        %v481 = vsub.f32 %v462, %v479
        %v482 = vsub.f32 %v463, %v480
        %v483 = vmul.f32 %v481, %v481
        %v484 = vmul.f32 %v482, %v482
        %v485 = vsel %vm465, %v483, 0.0
        %486 = vadd.xlane.f32.xlu0 %v485
        %v487 = vpop.xlane.xlu0 %486
        %v488 = vsel %vm465, %v484, 0.0
        %489 = vadd.xlane.f32.xlu0 %v488
        %v490 = vpop.xlane.xlu0 %489
        %v491 = vmul.f32 %v487, %v478
        %v492 = vmul.f32 %v490, %v478
        %v493 = vadd.f32 %v491, 1e-05
        %v494 = vadd.f32 %v492, 1e-05
        %v495 = vrsqrt.pop %v493
        %v496 = vmul.f32 %v495, %v493
        %v497 = vmul.f32 %v496, %v495
        %v498 = vmul.f32 0.5, %v497
        %v499 = vsub.f32 1.5, %v498
        %v500 = vmul.f32 %v495, %v499
        %vm501 = vweird.f32 %v493
        %vm502 = vweird.f32 %v495
        %vm503 = vmor %vm501, %vm502
        %v504 = vsel %vm503, %v495, %v500
        %v505 = vrsqrt.pop %v494
        %v506 = vmul.f32 %v505, %v494
        %v507 = vmul.f32 %v506, %v505
        %v508 = vmul.f32 0.5, %v507
        %v509 = vsub.f32 1.5, %v508
        %v510 = vmul.f32 %v505, %v509
        %vm511 = vweird.f32 %v494
        %vm512 = vweird.f32 %v505
        %vm513 = vmor %vm511, %vm512
        %v514 = vsel %vm513, %v505, %v510
        %v515 = vmul.f32 %v481, %v504
        %v516 = vmul.f32 %v482, %v514
        %v517 = vperm.slane %v464, 0
        %v518 = vmul.f32 %v515, %v517
        %v519 = vmul.f32 %v516, %v517
        %v520 = vperm.slane %v464, 1
        %v521 = vadd.f32 %v518, %v520
        %v522 = vadd.f32 %v519, %v520
        %v523 = vpack.c.bf16 %v522, %v521
        %v524 = vld [vmem:[%s433] sm:$0xf]
        %v525 = vld [vmem:[%s433 + $0x4] sm:$0xf]
        %v526 = vld [vmem:[%s433 + $0x8] sm:$0xf]
        %v527 = vld [vmem:[%s433 + $0xc] sm:$0xf]
        %v532 = vunpack.c.l.b16 %v524
        %v533 = vunpack.c.l.b16 %v525
        %v534 = vunpack.c.l.b16 %v526
        %v535 = vunpack.c.l.b16 %v527
        %v536 = vpack.c.b16 %v533, %v532
        %v537 = vpack.c.b16 %v535, %v534
        %v541 = vsel %vm465, %v523, 0
        %543 = vmatpush.bf16.msra.mxu0 0
        %544 = vmatpush.bf16.msra.mxu0 0
        %545 = vmatpush.bf16.msra.mxu0 0
        %546 = vmatpush.bf16.msra.mxu0 0
        %547 = vmatpush.bf16.msra.mxu0 0
        %548 = vmatpush.bf16.msra.mxu0 0
        %549 = vmatpush.bf16.msra.mxu0 %v537
        %550 = vmatpush.bf16.msra.mxu0 %v536
        %551 = vmatmul.bf16.gmra.mxu0 %v541
        %v552 = vpop.f32.mrf.mxu0
        %v553 = vadd.f32 0.0, %v552
        %v554 = vpop.f32.mrf.mxu0
        %v555 = vadd.f32 0.0, %v554
        %556 = vdwg.mxu0
        %v557 = vpack.c.bf16 %v553, %v553
        %v558 = vpack.c.bf16 %v555, %v555
        %561 = vrot.lane.b32.xlu0 %v557, 120
        %v562 = vpop.permute.xlu0 %561
        %563 = vrot.lane.b32.xlu0 %v558, 120
        %v564 = vpop.permute.xlu0 %563
        %565 = vrot.lane.b32.xlu0 %v557, 112
        %v566 = vpop.permute.xlu0 %565
        %567 = vrot.lane.b32.xlu0 %v558, 112
        %v568 = vpop.permute.xlu0 %567
        %569 = vrot.lane.b32.xlu0 %v557, 104
        %v570 = vpop.permute.xlu0 %569
        %571 = vrot.lane.b32.xlu0 %v558, 104
        %v572 = vpop.permute.xlu0 %571
        %v573 = vunpack.c.l.b16 %v557
        %v574 = vpack.c.b16 %v573, %v573
        %575 = vrot.lane.b32.xlu0 %v574, 96
        %v576 = vpop.permute.xlu0 %575
        %vm577 = vcmask 64512
        %v579 = vsel %vm577, %v557, 0
        %v582 = vsel %vm577, %v576, 0
        %584 = vmatpush.bf16.xpose.msra.mxu0 0
        %585 = vmatpush.bf16.xpose.msra.mxu0 0
        %586 = vmatpush.bf16.xpose.msra.mxu0 0
        %587 = vmatpush.bf16.xpose.msra.mxu0 0
        %588 = vmatpush.bf16.xpose.msra.mxu0 0
        %589 = vmatpush.bf16.xpose.msra.mxu0 0
        %590 = vmatpush.bf16.xpose.msra.mxu0 0
        %591 = vmatpush.bf16.xpose.msra.mxu0 %v582
        %592 = vmatmul.bf16.gmra.mxu0 %v579
        %v593 = vpop.f32.mrf.mxu0
        %v594 = vadd.f32 0.0, %v593
        %v595 = vpop.f32.mrf.mxu0
        %596 = vdwg.mxu0
        %v597 = vunpack.c.l.b16 %v558
        %v598 = vpack.c.b16 %v597, %v597
        %599 = vrot.lane.b32.xlu0 %v598, 96
        %v600 = vpop.permute.xlu0 %599
        %v602 = vsel %vm577, %v558, 0
        %v605 = vsel %vm577, %v600, 0
        %607 = vmatpush.bf16.xpose.msra.mxu0 0
        %608 = vmatpush.bf16.xpose.msra.mxu0 0
        %609 = vmatpush.bf16.xpose.msra.mxu0 0
        %610 = vmatpush.bf16.xpose.msra.mxu0 0
        %611 = vmatpush.bf16.xpose.msra.mxu0 0
        %612 = vmatpush.bf16.xpose.msra.mxu0 0
        %613 = vmatpush.bf16.xpose.msra.mxu0 0
        %614 = vmatpush.bf16.xpose.msra.mxu0 %v605
        %615 = vmatmul.bf16.gmra.mxu0 %v602
        %v616 = vpop.f32.mrf.mxu0
        %v617 = vadd.f32 0.0, %v616
        %v618 = vpop.f32.mrf.mxu0
        %619 = vdwg.mxu0
        %v620 = vunpack.c.l.b16 %v562
        %v621 = vpack.c.b16 %v620, %v620
        %622 = vrot.lane.b32.xlu0 %v621, 96
        %v623 = vpop.permute.xlu0 %622
        %v625 = vsel %vm577, %v562, 0
        %v628 = vsel %vm577, %v623, 0
        %630 = vmatpush.bf16.xpose.msra.mxu0 0
        %631 = vmatpush.bf16.xpose.msra.mxu0 0
        %632 = vmatpush.bf16.xpose.msra.mxu0 0
        %633 = vmatpush.bf16.xpose.msra.mxu0 0
        %634 = vmatpush.bf16.xpose.msra.mxu0 0
        %635 = vmatpush.bf16.xpose.msra.mxu0 0
        %636 = vmatpush.bf16.xpose.msra.mxu0 0
        %637 = vmatpush.bf16.xpose.msra.mxu0 %v628
        %638 = vmatmul.bf16.gmra.mxu0 %v625
        %v639 = vpop.f32.mrf.mxu0
        %v640 = vadd.f32 0.0, %v639
        %v641 = vpop.f32.mrf.mxu0
        %642 = vdwg.mxu0
        %v643 = vunpack.c.l.b16 %v564
        %v644 = vpack.c.b16 %v643, %v643
        %645 = vrot.lane.b32.xlu0 %v644, 96
        %v646 = vpop.permute.xlu0 %645
        %v648 = vsel %vm577, %v564, 0
        %v651 = vsel %vm577, %v646, 0
        %653 = vmatpush.bf16.xpose.msra.mxu0 0
        %654 = vmatpush.bf16.xpose.msra.mxu0 0
        %655 = vmatpush.bf16.xpose.msra.mxu0 0
        %656 = vmatpush.bf16.xpose.msra.mxu0 0
        %657 = vmatpush.bf16.xpose.msra.mxu0 0
        %658 = vmatpush.bf16.xpose.msra.mxu0 0
        %659 = vmatpush.bf16.xpose.msra.mxu0 0
        %660 = vmatpush.bf16.xpose.msra.mxu0 %v651
        %661 = vmatmul.bf16.gmra.mxu0 %v648
        %v662 = vpop.f32.mrf.mxu0
        %v663 = vadd.f32 0.0, %v662
        %v664 = vpop.f32.mrf.mxu0
        %665 = vdwg.mxu0
        %v666 = vunpack.c.l.b16 %v566
        %v667 = vpack.c.b16 %v666, %v666
        %668 = vrot.lane.b32.xlu0 %v667, 96
        %v669 = vpop.permute.xlu0 %668
        %v671 = vsel %vm577, %v566, 0
        %v674 = vsel %vm577, %v669, 0
        %676 = vmatpush.bf16.xpose.msra.mxu0 0
        %677 = vmatpush.bf16.xpose.msra.mxu0 0
        %678 = vmatpush.bf16.xpose.msra.mxu0 0
        %679 = vmatpush.bf16.xpose.msra.mxu0 0
        %680 = vmatpush.bf16.xpose.msra.mxu0 0
        %681 = vmatpush.bf16.xpose.msra.mxu0 0
        %682 = vmatpush.bf16.xpose.msra.mxu0 0
        %683 = vmatpush.bf16.xpose.msra.mxu0 %v674
        %684 = vmatmul.bf16.gmra.mxu0 %v671
        %v685 = vpop.f32.mrf.mxu0
        %v686 = vadd.f32 0.0, %v685
        %v687 = vpop.f32.mrf.mxu0
        %688 = vdwg.mxu0
        %v689 = vunpack.c.l.b16 %v568
        %v690 = vpack.c.b16 %v689, %v689
        %691 = vrot.lane.b32.xlu0 %v690, 96
        %v692 = vpop.permute.xlu0 %691
        %v694 = vsel %vm577, %v568, 0
        %v697 = vsel %vm577, %v692, 0
        %699 = vmatpush.bf16.xpose.msra.mxu0 0
        %700 = vmatpush.bf16.xpose.msra.mxu0 0
        %701 = vmatpush.bf16.xpose.msra.mxu0 0
        %702 = vmatpush.bf16.xpose.msra.mxu0 0
        %703 = vmatpush.bf16.xpose.msra.mxu0 0
        %704 = vmatpush.bf16.xpose.msra.mxu0 0
        %705 = vmatpush.bf16.xpose.msra.mxu0 0
        %706 = vmatpush.bf16.xpose.msra.mxu0 %v697
        %707 = vmatmul.bf16.gmra.mxu0 %v694
        %v708 = vpop.f32.mrf.mxu0
        %v709 = vadd.f32 0.0, %v708
        %v710 = vpop.f32.mrf.mxu0
        %711 = vdwg.mxu0
        %v712 = vunpack.c.l.b16 %v570
        %v713 = vpack.c.b16 %v712, %v712
        %714 = vrot.lane.b32.xlu0 %v713, 96
        %v715 = vpop.permute.xlu0 %714
        %v717 = vsel %vm577, %v570, 0
        %v720 = vsel %vm577, %v715, 0
        %722 = vmatpush.bf16.xpose.msra.mxu0 0
        %723 = vmatpush.bf16.xpose.msra.mxu0 0
        %724 = vmatpush.bf16.xpose.msra.mxu0 0
        %725 = vmatpush.bf16.xpose.msra.mxu0 0
        %726 = vmatpush.bf16.xpose.msra.mxu0 0
        %727 = vmatpush.bf16.xpose.msra.mxu0 0
        %728 = vmatpush.bf16.xpose.msra.mxu0 0
        %729 = vmatpush.bf16.xpose.msra.mxu0 %v720
        %730 = vmatmul.bf16.gmra.mxu0 %v717
        %v731 = vpop.f32.mrf.mxu0
        %v732 = vadd.f32 0.0, %v731
        %v733 = vpop.f32.mrf.mxu0
        %734 = vdwg.mxu0
        %v735 = vunpack.c.l.b16 %v572
        %v736 = vpack.c.b16 %v735, %v735
        %737 = vrot.lane.b32.xlu0 %v736, 96
        %v738 = vpop.permute.xlu0 %737
        %v740 = vsel %vm577, %v572, 0
        %v743 = vsel %vm577, %v738, 0
        %745 = vmatpush.bf16.xpose.msra.mxu0 0
        %746 = vmatpush.bf16.xpose.msra.mxu0 0
        %747 = vmatpush.bf16.xpose.msra.mxu0 0
        %748 = vmatpush.bf16.xpose.msra.mxu0 0
        %749 = vmatpush.bf16.xpose.msra.mxu0 0
        %750 = vmatpush.bf16.xpose.msra.mxu0 0
        %751 = vmatpush.bf16.xpose.msra.mxu0 0
        %752 = vmatpush.bf16.xpose.msra.mxu0 %v743
        %753 = vmatmul.bf16.gmra.mxu0 %v740
        %v754 = vpop.f32.mrf.mxu0
        %v755 = vadd.f32 0.0, %v754
        %v756 = vpop.f32.mrf.mxu0
        %757 = vdwg.mxu0
        %v758 = vsel %vm577, %v594, -inf
        %759 = vmax.xlane.f32.xlu0 %v758
        %v760 = vpop.xlane.xlu0 %759
        %v761 = vsel %vm577, %v617, -inf
        %762 = vmax.xlane.f32.xlu0 %v761
        %v763 = vpop.xlane.xlu0 %762
        %v764 = vsel %vm577, %v640, -inf
        %765 = vmax.xlane.f32.xlu0 %v764
        %v766 = vpop.xlane.xlu0 %765
        %v767 = vsel %vm577, %v663, -inf
        %768 = vmax.xlane.f32.xlu0 %v767
        %v769 = vpop.xlane.xlu0 %768
        %v770 = vsel %vm577, %v686, -inf
        %771 = vmax.xlane.f32.xlu0 %v770
        %v772 = vpop.xlane.xlu0 %771
        %v773 = vsel %vm577, %v709, -inf
        %774 = vmax.xlane.f32.xlu0 %v773
        %v775 = vpop.xlane.xlu0 %774
        %v776 = vsel %vm577, %v732, -inf
        %777 = vmax.xlane.f32.xlu0 %v776
        %v778 = vpop.xlane.xlu0 %777
        %v779 = vsel %vm577, %v755, -inf
        %780 = vmax.xlane.f32.xlu0 %v779
        %v781 = vpop.xlane.xlu0 %780
        %v782 = vsub.f32 %v594, %v760
        %v783 = vsub.f32 %v617, %v763
        %v784 = vsub.f32 %v640, %v766
        %v785 = vsub.f32 %v663, %v769
        %v786 = vsub.f32 %v686, %v772
        %v787 = vsub.f32 %v709, %v775
        %v788 = vsub.f32 %v732, %v778
        %v789 = vsub.f32 %v755, %v781
        %v790 = vmul.f32 %v782, 1.442695
        %v791 = vpow.pop %v790
        %v792 = vmul.f32 %v783, 1.442695
        %v793 = vpow.pop %v792
        %v794 = vmul.f32 %v784, 1.442695
        %v795 = vpow.pop %v794
        %v796 = vmul.f32 %v785, 1.442695
        %v797 = vpow.pop %v796
        %v798 = vmul.f32 %v786, 1.442695
        %v799 = vpow.pop %v798
        %v800 = vmul.f32 %v787, 1.442695
        %v801 = vpow.pop %v800
        %v802 = vmul.f32 %v788, 1.442695
        %v803 = vpow.pop %v802
        %v804 = vmul.f32 %v789, 1.442695
        %v805 = vpow.pop %v804
        %v806 = vsel %vm577, %v791, 0.0
        %807 = vadd.xlane.f32.xlu0 %v806
        %v808 = vpop.xlane.xlu0 %807
        %v809 = vsel %vm577, %v793, 0.0
        %810 = vadd.xlane.f32.xlu0 %v809
        %v811 = vpop.xlane.xlu0 %810
        %v812 = vsel %vm577, %v795, 0.0
        %813 = vadd.xlane.f32.xlu0 %v812
        %v814 = vpop.xlane.xlu0 %813
        %v815 = vsel %vm577, %v797, 0.0
        %816 = vadd.xlane.f32.xlu0 %v815
        %v817 = vpop.xlane.xlu0 %816
        %v818 = vsel %vm577, %v799, 0.0
        %819 = vadd.xlane.f32.xlu0 %v818
        %v820 = vpop.xlane.xlu0 %819
        %v821 = vsel %vm577, %v801, 0.0
        %822 = vadd.xlane.f32.xlu0 %v821
        %v823 = vpop.xlane.xlu0 %822
        %v824 = vsel %vm577, %v803, 0.0
        %825 = vadd.xlane.f32.xlu0 %v824
        %v826 = vpop.xlane.xlu0 %825
        %v827 = vsel %vm577, %v805, 0.0
        %828 = vadd.xlane.f32.xlu0 %v827
        %v829 = vpop.xlane.xlu0 %828
        %v830 = vrcp.pop %v808
        %v831 = vrcp.pop %v811
        %v832 = vrcp.pop %v814
        %v833 = vrcp.pop %v817
        %v834 = vrcp.pop %v820
        %v835 = vrcp.pop %v823
        %v836 = vrcp.pop %v826
        %v837 = vrcp.pop %v829
        %v838 = vmul.f32 %v791, %v830
        %v839 = vmul.f32 %v793, %v831
        %v840 = vmul.f32 %v795, %v832
        %v841 = vmul.f32 %v797, %v833
        %v842 = vmul.f32 %v799, %v834
        %v843 = vmul.f32 %v801, %v835
        %v844 = vmul.f32 %v803, %v836
        %v845 = vmul.f32 %v805, %v837
        %v846 = vpack.c.bf16 %v838, %v838
        %v847 = vpack.c.bf16 %v839, %v839
        %v848 = vpack.c.bf16 %v840, %v840
        %v849 = vpack.c.bf16 %v841, %v841
        %v850 = vpack.c.bf16 %v842, %v842
        %v851 = vpack.c.bf16 %v843, %v843
        %v852 = vpack.c.bf16 %v844, %v844
        %v853 = vpack.c.bf16 %v845, %v845
        %854 = vrot.lane.b32.xlu0 %v574, 64
        %v855 = vpop.permute.xlu0 %854
        %v857 = vsel %vm577, %v846, 0
        %vm859 = vcmask 1043456
        %v861 = vsel %vm859, %v855, 0
        %863 = vmatpush.bf16.msra.mxu0 0
        %864 = vmatpush.bf16.msra.mxu0 0
        %865 = vmatpush.bf16.msra.mxu0 0
        %866 = vmatpush.bf16.msra.mxu0 0
        %867 = vmatpush.bf16.msra.mxu0 0
        %868 = vmatpush.bf16.msra.mxu0 0
        %869 = vmatpush.bf16.msra.mxu0 0
        %870 = vmatpush.bf16.msra.mxu0 %v861
        %871 = vmatmul.bf16.gmra.mxu0 %v857
        %v872 = vpop.f32.mrf.mxu0
        %v873 = vadd.f32 0.0, %v872
        %v874 = vpop.f32.mrf.mxu0
        %875 = vdwg.mxu0
        %876 = vrot.lane.b32.xlu0 %v598, 64
        %v877 = vpop.permute.xlu0 %876
        %v879 = vsel %vm577, %v847, 0
        %v882 = vsel %vm859, %v877, 0
        %884 = vmatpush.bf16.msra.mxu0 0
        %885 = vmatpush.bf16.msra.mxu0 0
        %886 = vmatpush.bf16.msra.mxu0 0
        %887 = vmatpush.bf16.msra.mxu0 0
        %888 = vmatpush.bf16.msra.mxu0 0
        %889 = vmatpush.bf16.msra.mxu0 0
        %890 = vmatpush.bf16.msra.mxu0 0
        %891 = vmatpush.bf16.msra.mxu0 %v882
        %892 = vmatmul.bf16.gmra.mxu0 %v879
        %v893 = vpop.f32.mrf.mxu0
        %v894 = vadd.f32 0.0, %v893
        %v895 = vpop.f32.mrf.mxu0
        %896 = vdwg.mxu0
        %897 = vrot.lane.b32.xlu0 %v621, 64
        %v898 = vpop.permute.xlu0 %897
        %v900 = vsel %vm577, %v848, 0
        %v903 = vsel %vm859, %v898, 0
        %905 = vmatpush.bf16.msra.mxu0 0
        %906 = vmatpush.bf16.msra.mxu0 0
        %907 = vmatpush.bf16.msra.mxu0 0
        %908 = vmatpush.bf16.msra.mxu0 0
        %909 = vmatpush.bf16.msra.mxu0 0
        %910 = vmatpush.bf16.msra.mxu0 0
        %911 = vmatpush.bf16.msra.mxu0 0
        %912 = vmatpush.bf16.msra.mxu0 %v903
        %913 = vmatmul.bf16.gmra.mxu0 %v900
        %v914 = vpop.f32.mrf.mxu0
        %v915 = vadd.f32 0.0, %v914
        %v916 = vpop.f32.mrf.mxu0
        %917 = vdwg.mxu0
        %918 = vrot.lane.b32.xlu0 %v644, 64
        %v919 = vpop.permute.xlu0 %918
        %v921 = vsel %vm577, %v849, 0
        %v924 = vsel %vm859, %v919, 0
        %926 = vmatpush.bf16.msra.mxu0 0
        %927 = vmatpush.bf16.msra.mxu0 0
        %928 = vmatpush.bf16.msra.mxu0 0
        %929 = vmatpush.bf16.msra.mxu0 0
        %930 = vmatpush.bf16.msra.mxu0 0
        %931 = vmatpush.bf16.msra.mxu0 0
        %932 = vmatpush.bf16.msra.mxu0 0
        %933 = vmatpush.bf16.msra.mxu0 %v924
        %934 = vmatmul.bf16.gmra.mxu0 %v921
        %v935 = vpop.f32.mrf.mxu0
        %v936 = vadd.f32 0.0, %v935
        %v937 = vpop.f32.mrf.mxu0
        %938 = vdwg.mxu0
        %939 = vrot.lane.b32.xlu0 %v667, 64
        %v940 = vpop.permute.xlu0 %939
        %v942 = vsel %vm577, %v850, 0
        %v945 = vsel %vm859, %v940, 0
        %947 = vmatpush.bf16.msra.mxu0 0
        %948 = vmatpush.bf16.msra.mxu0 0
        %949 = vmatpush.bf16.msra.mxu0 0
        %950 = vmatpush.bf16.msra.mxu0 0
        %951 = vmatpush.bf16.msra.mxu0 0
        %952 = vmatpush.bf16.msra.mxu0 0
        %953 = vmatpush.bf16.msra.mxu0 0
        %954 = vmatpush.bf16.msra.mxu0 %v945
        %955 = vmatmul.bf16.gmra.mxu0 %v942
        %v956 = vpop.f32.mrf.mxu0
        %v957 = vadd.f32 0.0, %v956
        %v958 = vpop.f32.mrf.mxu0
        %959 = vdwg.mxu0
        %960 = vrot.lane.b32.xlu0 %v690, 64
        %v961 = vpop.permute.xlu0 %960
        %v963 = vsel %vm577, %v851, 0
        %v966 = vsel %vm859, %v961, 0
        %968 = vmatpush.bf16.msra.mxu0 0
        %969 = vmatpush.bf16.msra.mxu0 0
        %970 = vmatpush.bf16.msra.mxu0 0
        %971 = vmatpush.bf16.msra.mxu0 0
        %972 = vmatpush.bf16.msra.mxu0 0
        %973 = vmatpush.bf16.msra.mxu0 0
        %974 = vmatpush.bf16.msra.mxu0 0
        %975 = vmatpush.bf16.msra.mxu0 %v966
        %976 = vmatmul.bf16.gmra.mxu0 %v963
        %v977 = vpop.f32.mrf.mxu0
        %v978 = vadd.f32 0.0, %v977
        %v979 = vpop.f32.mrf.mxu0
        %980 = vdwg.mxu0
        %981 = vrot.lane.b32.xlu0 %v713, 64
        %v982 = vpop.permute.xlu0 %981
        %v984 = vsel %vm577, %v852, 0
        %v987 = vsel %vm859, %v982, 0
        %989 = vmatpush.bf16.msra.mxu0 0
        %990 = vmatpush.bf16.msra.mxu0 0
        %991 = vmatpush.bf16.msra.mxu0 0
        %992 = vmatpush.bf16.msra.mxu0 0
        %993 = vmatpush.bf16.msra.mxu0 0
        %994 = vmatpush.bf16.msra.mxu0 0
        %995 = vmatpush.bf16.msra.mxu0 0
        %996 = vmatpush.bf16.msra.mxu0 %v987
        %997 = vmatmul.bf16.gmra.mxu0 %v984
        %v998 = vpop.f32.mrf.mxu0
        %v999 = vadd.f32 0.0, %v998
        %v1000 = vpop.f32.mrf.mxu0
        %1001 = vdwg.mxu0
        %1002 = vrot.lane.b32.xlu0 %v736, 64
        %v1003 = vpop.permute.xlu0 %1002
        %v1005 = vsel %vm577, %v853, 0
        %v1008 = vsel %vm859, %v1003, 0
        %1010 = vmatpush.bf16.msra.mxu0 0
        %1011 = vmatpush.bf16.msra.mxu0 0
        %1012 = vmatpush.bf16.msra.mxu0 0
        %1013 = vmatpush.bf16.msra.mxu0 0
        %1014 = vmatpush.bf16.msra.mxu0 0
        %1015 = vmatpush.bf16.msra.mxu0 0
        %1016 = vmatpush.bf16.msra.mxu0 0
        %1017 = vmatpush.bf16.msra.mxu0 %v1008
        %1018 = vmatmul.bf16.gmra.mxu0 %v1005
        %v1019 = vpop.f32.mrf.mxu0
        %v1020 = vadd.f32 0.0, %v1019
        %v1021 = vpop.f32.mrf.mxu0
        %1022 = vdwg.mxu0
        %v1023 = vpack.c.bf16 %v873, %v873
        %v1024 = vpack.c.bf16 %v894, %v894
        %v1025 = vpack.c.bf16 %v915, %v915
        %v1026 = vpack.c.bf16 %v936, %v936
        %v1027 = vpack.c.bf16 %v957, %v957
        %v1028 = vpack.c.bf16 %v978, %v978
        %v1029 = vpack.c.bf16 %v999, %v999
        %v1030 = vpack.c.bf16 %v1020, %v1020
        %v1033 = vunpack.c.l.b16 %v1023
        %v1034 = vunpack.c.l.b16 %v1024
        %v1035 = vpack.c.b16 %v1034, %v1033
        %v1038 = vunpack.c.l.b16 %v1025
        %v1039 = vunpack.c.l.b16 %v1026
        %v1040 = vpack.c.b16 %v1039, %v1038
        %1041 = vrot.lane.b32.xlu0 %v1040, 8
        %v1042 = vpop.permute.xlu0 %1041
        %v1045 = vunpack.c.l.b16 %v1027
        %v1046 = vunpack.c.l.b16 %v1028
        %v1047 = vpack.c.b16 %v1046, %v1045
        %1048 = vrot.lane.b32.xlu0 %v1047, 16
        %v1049 = vpop.permute.xlu0 %1048
        %v1052 = vunpack.c.l.b16 %v1029
        %v1053 = vunpack.c.l.b16 %v1030
        %v1054 = vpack.c.b16 %v1053, %v1052
        %1055 = vrot.lane.b32.xlu0 %v1054, 24
        %v1056 = vpop.permute.xlu0 %1055
        %v1059 = vsel %vm577, %v1035, %v1042
        %vm1060 = vcmask 130048
        %v1062 = vsel %vm1060, %v1059, %v1049
        %vm1063 = vcmask 195584
        %v1065 = vsel %vm1063, %v1062, %v1056
        %v1066 = vld [vmem:[%s438] sm:$0xf]
        %v1067 = vld [vmem:[%s438 + $0x4] sm:$0xf]
        %v1068 = vld [vmem:[%s438 + $0x8] sm:$0xf]
        %v1069 = vld [vmem:[%s438 + $0xc] sm:$0xf]
        %v1070 = vperm.slane %v464, 2
        %v1075 = vunpack.c.l.b16 %v1066
        %v1076 = vunpack.c.l.b16 %v1067
        %v1077 = vunpack.c.l.b16 %v1068
        %v1078 = vunpack.c.l.b16 %v1069
        %v1079 = vpack.c.b16 %v1076, %v1075
        %v1080 = vpack.c.b16 %v1078, %v1077
        %v1083 = vsel %vm465, %v1065, 0
        %1085 = vmatpush.bf16.msra.mxu0 0
        %1086 = vmatpush.bf16.msra.mxu0 0
        %1087 = vmatpush.bf16.msra.mxu0 0
        %1088 = vmatpush.bf16.msra.mxu0 0
        %1089 = vmatpush.bf16.msra.mxu0 0
        %1090 = vmatpush.bf16.msra.mxu0 0
        %1091 = vmatpush.bf16.msra.mxu0 %v1080
        %1092 = vmatpush.bf16.msra.mxu0 %v1079
        %1093 = vmatmul.bf16.gmra.mxu0 %v1083
        %v1094 = vpop.f32.mrf.mxu0
        %v1095 = vadd.f32 %v1070, %v1094
        %v1096 = vpop.f32.mrf.mxu0
        %v1097 = vadd.f32 %v1070, %v1096
        %1098 = vdwg.mxu0
        %v1099 = vadd.f32 %v1095, %v462
        %v1100 = vadd.f32 %v1097, %v463
        %v1101 = vsel %vm465, %v1099, 0.0
        %1102 = vadd.xlane.f32.xlu0 %v1101
        %v1103 = vpop.xlane.xlu0 %1102
        %v1104 = vsel %vm465, %v1100, 0.0
        %1105 = vadd.xlane.f32.xlu0 %v1104
        %v1106 = vpop.xlane.xlu0 %1105
        %v1107 = vmul.f32 %v1103, %v478
        %v1108 = vmul.f32 %v1106, %v478
        %v1109 = vsub.f32 %v1099, %v1107
        %v1110 = vsub.f32 %v1100, %v1108
        %v1111 = vmul.f32 %v1109, %v1109
        %v1112 = vmul.f32 %v1110, %v1110
        %v1113 = vsel %vm465, %v1111, 0.0
        %1114 = vadd.xlane.f32.xlu0 %v1113
        %v1115 = vpop.xlane.xlu0 %1114
        %v1116 = vsel %vm465, %v1112, 0.0
        %1117 = vadd.xlane.f32.xlu0 %v1116
        %v1118 = vpop.xlane.xlu0 %1117
        %v1119 = vmul.f32 %v1115, %v478
        %v1120 = vmul.f32 %v1118, %v478
        %v1121 = vadd.f32 %v1119, 1e-05
        %v1122 = vadd.f32 %v1120, 1e-05
        %v1123 = vrsqrt.pop %v1121
        %v1124 = vmul.f32 %v1123, %v1121
        %v1125 = vmul.f32 %v1124, %v1123
        %v1126 = vmul.f32 0.5, %v1125
        %v1127 = vsub.f32 1.5, %v1126
        %v1128 = vmul.f32 %v1123, %v1127
        %vm1129 = vweird.f32 %v1121
        %vm1130 = vweird.f32 %v1123
        %vm1131 = vmor %vm1129, %vm1130
        %v1132 = vsel %vm1131, %v1123, %v1128
        %v1133 = vrsqrt.pop %v1122
        %v1134 = vmul.f32 %v1133, %v1122
        %v1135 = vmul.f32 %v1134, %v1133
        %v1136 = vmul.f32 0.5, %v1135
        %v1137 = vsub.f32 1.5, %v1136
        %v1138 = vmul.f32 %v1133, %v1137
        %vm1139 = vweird.f32 %v1122
        %vm1140 = vweird.f32 %v1133
        %vm1141 = vmor %vm1139, %vm1140
        %v1142 = vsel %vm1141, %v1133, %v1138
        %v1143 = vmul.f32 %v1109, %v1132
        %v1144 = vmul.f32 %v1110, %v1142
        %v1145 = vperm.slane %v464, 3
        %v1146 = vmul.f32 %v1143, %v1145
        %v1147 = vmul.f32 %v1144, %v1145
        %v1148 = vperm.slane %v464, 4
        %v1149 = vadd.f32 %v1146, %v1148
        %v1150 = vadd.f32 %v1147, %v1148
        %v1151 = vpack.c.bf16 %v1150, %v1149
        %v1152 = vld [vmem:[%s362] sm:$0xf]
        %v1153 = vld [vmem:[%s362 + $0x4] sm:$0xf]
        %v1154 = vld [vmem:[%s362 + $0x8] sm:$0xf]
        %v1155 = vld [vmem:[%s362 + $0xc] sm:$0xf]
        %v1156 = vld [vmem:[%s450] sm:$0x1]
        %v1158 = vperm.slane %v1156, 0
        %v1164 = vunpack.c.l.b16 %v1152
        %v1165 = vunpack.c.l.b16 %v1153
        %v1166 = vunpack.c.l.b16 %v1154
        %v1167 = vunpack.c.l.b16 %v1155
        %v1168 = vpack.c.b16 %v1165, %v1164
        %v1169 = vpack.c.b16 %v1167, %v1166
        %v1173 = vsel %vm465, %v1151, 0
        %1175 = vmatpush.bf16.msra.mxu0 0
        %1176 = vmatpush.bf16.msra.mxu0 0
        %1177 = vmatpush.bf16.msra.mxu0 0
        %1178 = vmatpush.bf16.msra.mxu0 0
        %1179 = vmatpush.bf16.msra.mxu0 0
        %1180 = vmatpush.bf16.msra.mxu0 0
        %1181 = vmatpush.bf16.msra.mxu0 %v1169
        %1182 = vmatpush.bf16.msra.mxu0 %v1168
        %1183 = vmatmul.bf16.gmra.mxu0 %v1173
        %v1184 = vpop.f32.mrf.mxu0
        %v1185 = vadd.f32 %v1158, %v1184
        %v1186 = vpop.f32.mrf.mxu0
        %v1187 = vadd.f32 %v1158, %v1186
        %1188 = vdwg.mxu0
        %v1189 = vmul.f32 %v1185, 0.70710677
        %v1190 = vmul.f32 %v1187, 0.70710677
        %v1191 = vand.u32 2147483647, %v1189
        %v1192 = vand.u32 2147483647, %v1190
        %v1193 = vmul.f32 %v1191, 0.3275911
        %v1194 = vmul.f32 %v1192, 0.3275911
        %v1195 = vadd.f32 %v1193, 1.0
        %v1196 = vadd.f32 %v1194, 1.0
        %v1197 = vrcp.pop %v1195
        %v1198 = vmul.f32 %v1195, %v1197
        %v1199 = vsub.f32 1.0, %v1198
        %v1200 = vmul.f32 %v1197, %v1199
        %v1201 = vadd.f32 %v1197, %v1200
        %vm1202 = vweird.f32 %v1195
        %vm1203 = vweird.f32 %v1197
        %vm1204 = vmor %vm1202, %vm1203
        %v1205 = vsel %vm1204, %v1197, %v1201
        %v1206 = vand.u32 2147483647, %v1195
        %vm1207 = vcmp.eq.f32.partialorder %v1206, 8.507059e+37
        %v1208 = vand.u32 %v1195, 2147483648
        %v1209 = vor.u32 1.1754944e-38, %v1208
        %v1210 = vsel %vm1207, %v1209, %v1205
        %v1211 = vmul.f32 1.0, %v1210
        %v1212 = vrcp.pop %v1196
        %v1213 = vmul.f32 %v1196, %v1212
        %v1214 = vsub.f32 1.0, %v1213
        %v1215 = vmul.f32 %v1212, %v1214
        %v1216 = vadd.f32 %v1212, %v1215
        %vm1217 = vweird.f32 %v1196
        %vm1218 = vweird.f32 %v1212
        %vm1219 = vmor %vm1217, %vm1218
        %v1220 = vsel %vm1219, %v1212, %v1216
        %v1221 = vand.u32 2147483647, %v1196
        %vm1222 = vcmp.eq.f32.partialorder %v1221, 8.507059e+37
        %v1223 = vand.u32 %v1196, 2147483648
        %v1224 = vor.u32 1.1754944e-38, %v1223
        %v1225 = vsel %vm1222, %v1224, %v1220
        %v1226 = vmul.f32 1.0, %v1225
        %v1227 = vmul.f32 %v1211, 1.0614054
        %v1228 = vmul.f32 %v1226, 1.0614054
        %v1229 = vadd.f32 %v1227, -1.4531521
        %v1230 = vadd.f32 %v1228, -1.4531521
        %v1231 = vmul.f32 %v1229, %v1211
        %v1232 = vmul.f32 %v1230, %v1226
        %v1233 = vadd.f32 %v1231, 1.4214138
        %v1234 = vadd.f32 %v1232, 1.4214138
        %v1235 = vmul.f32 %v1233, %v1211
        %v1236 = vmul.f32 %v1234, %v1226
        %v1237 = vadd.f32 %v1235, -0.28449672
        %v1238 = vadd.f32 %v1236, -0.28449672
        %v1239 = vmul.f32 %v1237, %v1211
        %v1240 = vmul.f32 %v1238, %v1226
        %v1241 = vadd.f32 %v1239, 0.2548296
        %v1242 = vadd.f32 %v1240, 0.2548296
        %v1243 = vmul.f32 %v1241, %v1211
        %v1244 = vmul.f32 %v1242, %v1226
        %v1245 = vsub.f32 0.0, %v1191
        %v1246 = vsub.f32 0.0, %v1192
        %v1247 = vmul.f32 %v1245, %v1191
        %v1248 = vmul.f32 %v1246, %v1192
        %v1249 = vmul.f32 %v1247, 1.442695
        %v1250 = vpow.pop %v1249
        %v1251 = vmul.f32 %v1248, 1.442695
        %v1252 = vpow.pop %v1251
        %v1253 = vmul.f32 %v1243, %v1250
        %v1254 = vmul.f32 %v1244, %v1252
        %v1255 = vsub.f32 1.0, %v1253
        %v1256 = vsub.f32 1.0, %v1254
        %vm1257 = vcmp.ge.f32.partialorder %v1189, 0.0
        %vm1258 = vcmp.ge.f32.partialorder %v1190, 0.0
        %v1259 = vsub.f32 0.0, %v1255
        %v1260 = vsub.f32 0.0, %v1256
        %v1261 = vsel %vm1257, %v1255, %v1259
        %v1262 = vsel %vm1258, %v1256, %v1260
        %v1263 = vmul.f32 %v1185, 0.5
        %v1264 = vmul.f32 %v1187, 0.5
        %v1265 = vadd.f32 %v1261, 1.0
        %v1266 = vadd.f32 %v1262, 1.0
        %v1267 = vmul.f32 %v1263, %v1265
        %v1268 = vmul.f32 %v1264, %v1266
        %v1269 = vpack.c.bf16 %v1268, %v1267
        %v1270 = vld [vmem:[%s443] sm:$0xf]
        %v1271 = vld [vmem:[%s443 + $0x4] sm:$0xf]
        %v1272 = vld [vmem:[%s443 + $0x8] sm:$0xf]
        %v1273 = vld [vmem:[%s443 + $0xc] sm:$0xf]
        %v1274 = vld [vmem:[%s443 + $0x10] sm:$0xf]
        %v1275 = vld [vmem:[%s443 + $0x14] sm:$0xf]
        %v1276 = vld [vmem:[%s443 + $0x18] sm:$0xf]
        %v1277 = vld [vmem:[%s443 + $0x1c] sm:$0xf]
        %v1278 = vperm.slane %v464, 5
        %v1287 = vunpack.c.l.b16 %v1270
        %v1288 = vunpack.c.l.b16 %v1271
        %v1289 = vunpack.c.l.b16 %v1272
        %v1290 = vunpack.c.l.b16 %v1273
        %v1291 = vunpack.c.l.b16 %v1274
        %v1292 = vunpack.c.l.b16 %v1275
        %v1293 = vunpack.c.l.b16 %v1276
        %v1294 = vunpack.c.l.b16 %v1277
        %v1295 = vpack.c.b16 %v1288, %v1287
        %v1296 = vpack.c.b16 %v1290, %v1289
        %v1297 = vpack.c.b16 %v1292, %v1291
        %v1298 = vpack.c.b16 %v1294, %v1293
        %vm1303 = vcmask 523264
        %v1305 = vsel %vm1303, %v1269, 0
        %1307 = vmatpush.bf16.msra.mxu0 0
        %1308 = vmatpush.bf16.msra.mxu0 0
        %1309 = vmatpush.bf16.msra.mxu0 0
        %1310 = vmatpush.bf16.msra.mxu0 0
        %1311 = vmatpush.bf16.msra.mxu0 %v1298
        %1312 = vmatpush.bf16.msra.mxu0 %v1297
        %1313 = vmatpush.bf16.msra.mxu0 %v1296
        %1314 = vmatpush.bf16.msra.mxu0 %v1295
        %1315 = vmatmul.bf16.gmra.mxu0 %v1305
        %v1316 = vpop.f32.mrf.mxu0
        %v1317 = vadd.f32 %v1278, %v1316
        %v1318 = vpop.f32.mrf.mxu0
        %v1319 = vadd.f32 %v1278, %v1318
        %1320 = vdwg.mxu0
        %v1321 = vadd.f32 %v1317, %v1099
        %v1322 = vadd.f32 %v1319, %v1100
        %1323 = vst.msk [vmem:[#allocation2] sm:$0xff] %vm465, %v1321
        %1324 = vst.msk [vmem:[#allocation2 + $0x8] sm:$0xff] %vm465, %v1322
        %p1325 = scmp.eq.s32.totalorder %s30, 1
        // Predicated region
        $region61: #{tpu_custom_call.1} parent=51 // pred_check
          %p1326 = pneg %p1325
        $region62: #{tpu_custom_call.1} parent=51 // pred_check_branch
          %1328 = sbr.rel (%p1326) target = $region64
        $region63: #{tpu_custom_call.1} parent=51 // pred_region
          %v1329 = vld [vmem:[%s7] sm:$0x3]
          %v1330 = vsel %vm465, %v1321, 0.0
          %1331 = vadd.xlane.f32.xlu0 %v1330
          %v1332 = vpop.xlane.xlu0 %1331
          %v1333 = vsel %vm465, %v1322, 0.0
          %1334 = vadd.xlane.f32.xlu0 %v1333
          %v1335 = vpop.xlane.xlu0 %1334
          %v1336 = vmul.f32 %v1332, %v478
          %v1337 = vmul.f32 %v1335, %v478
          %v1338 = vsub.f32 %v1321, %v1336
          %v1339 = vsub.f32 %v1322, %v1337
          %v1340 = vmul.f32 %v1338, %v1338
          %v1341 = vmul.f32 %v1339, %v1339
          %v1342 = vsel %vm465, %v1340, 0.0
          %1343 = vadd.xlane.f32.xlu0 %v1342
          %v1344 = vpop.xlane.xlu0 %1343
          %v1345 = vsel %vm465, %v1341, 0.0
          %1346 = vadd.xlane.f32.xlu0 %v1345
          %v1347 = vpop.xlane.xlu0 %1346
          %v1348 = vmul.f32 %v1344, %v478
          %v1349 = vmul.f32 %v1347, %v478
          %v1350 = vadd.f32 %v1348, 1e-05
          %v1351 = vadd.f32 %v1349, 1e-05
          %v1352 = vrsqrt.pop %v1350
          %v1353 = vmul.f32 %v1352, %v1350
          %v1354 = vmul.f32 %v1353, %v1352
          %v1355 = vmul.f32 0.5, %v1354
          %v1356 = vsub.f32 1.5, %v1355
          %v1357 = vmul.f32 %v1352, %v1356
          %vm1358 = vweird.f32 %v1350
          %vm1359 = vweird.f32 %v1352
          %vm1360 = vmor %vm1358, %vm1359
          %v1361 = vsel %vm1360, %v1352, %v1357
          %v1362 = vrsqrt.pop %v1351
          %v1363 = vmul.f32 %v1362, %v1351
          %v1364 = vmul.f32 %v1363, %v1362
          %v1365 = vmul.f32 0.5, %v1364
          %v1366 = vsub.f32 1.5, %v1365
          %v1367 = vmul.f32 %v1362, %v1366
          %vm1368 = vweird.f32 %v1351
          %vm1369 = vweird.f32 %v1362
          %vm1370 = vmor %vm1368, %vm1369
          %v1371 = vsel %vm1370, %v1362, %v1367
          %v1372 = vmul.f32 %v1338, %v1361
          %v1373 = vmul.f32 %v1339, %v1371
          %v1374 = vperm.slane %v1329, 0
          %v1375 = vmul.f32 %v1372, %v1374
          %v1376 = vmul.f32 %v1373, %v1374
          %v1377 = vperm.slane %v1329, 1
          %v1378 = vadd.f32 %v1375, %v1377
          %v1379 = vadd.f32 %v1376, %v1377
          %1380 = vst.msk [vmem:[%s422] sm:$0xff] %vm465, %v1378
          %1381 = vst.msk [vmem:[%s422 + $0x8] sm:$0xff] %vm465, %v1379
        $region64: #{tpu_custom_call.1} parent=51 // pred_fallthru
          _
        %s1382 = sand.u32 %s248, 1
        %s1383 = scalar_lea.sflag [#allocation5], %s1382
        %s1384 = sand.u32 %s248, 1
        %s1385 = smul.addr %s1384, 16
        %s1386 = scalar_lea.vmem [#allocation6], %s1385
        // Predicated region
        $region65: #{tpu_custom_call.1} parent=51 // pred_check
          %p1387 = pneg %p258
        $region66: #{tpu_custom_call.1} parent=51 // pred_check_branch
          %1389 = sbr.rel (%p1387) target = $region68
        $region67: #{tpu_custom_call.1} parent=51 // pred_region
          %s1390 = smul.u32 2, %s29
          %1392 = vsyncadd %s1383, 0
          %s1393 = smul.addr %s1390, 8
          %s1394 = scalar_lea.hbm %s8, %s1393
          %s1395 = sshll.u32 %s1386, 4
          %s1396 = int_to_ptr.vmem [resolvable:$true] %s1395
          %s1397 = sshll.u32 %s1394, 4
          %s1398 = int_to_ptr.hbm [resolvable:$true] %s1397
          %1403 = dma.vmem_to_hbm [thread:$0]  %s1396, 256, %s1398, %s1383, 128, 128, 8
        $region68: #{tpu_custom_call.1} parent=51 // pred_fallthru
          _
      $region52: #{tpu_custom_call.1} parent=5 // pred_fallthru
        _
      %p1404 = scmp.le.s32.totalorder 2, %s20
      // Predicated region
      $region69: #{tpu_custom_call.1} parent=5 // pred_check
        %p1405 = pneg %p1404
      $region70: #{tpu_custom_call.1} parent=5 // pred_check_branch
        %1407 = sbr.rel (%p1405) target = $region72
      $region71: #{tpu_custom_call.1} parent=5 // pred_region
        %s1408 = ssub.s32 %s20, 2
        // Predicated region
        $region73: #{tpu_custom_call.1} parent=71 // pred_check
          %p1409 = pneg %p264
        $region74: #{tpu_custom_call.1} parent=71 // pred_check_branch
          %1411 = sbr.rel (%p1409) target = $region76
        $region75: #{tpu_custom_call.1} parent=71 // pred_region
          %s1412 = sand.u32 %s249, 1
          %s1413 = scalar_lea.sflag [#allocation5], %s1412
          %s1414 = sand.u32 %s249, 1
          %s1415 = smul.addr %s1414, 16
          %s1416 = scalar_lea.vmem [#allocation6], %s1415
          %1418 = dma.done %s1413, 256
        $region76: #{tpu_custom_call.1} parent=71 // pred_fallthru
          _
      $region72: #{tpu_custom_call.1} parent=5 // pred_fallthru
        _
    $region6: #{tpu_custom_call.1} parent=1 // loop_footer
      %s24 = sadd.s32 1, %s20
    $region7: #{tpu_custom_call.1} parent=1 // loop_footer_branch
      %19 = sbr.rel target = $region3
    $region8: #{tpu_custom_call.1} parent=1 // loop_exit
      _
    %1419 = vsyncpa [#allocation4], 1
    %s1420 = scalar_lea.sflag [#allocation4], 1
    %1421 = vsyncpa %s1420, 1
    %1422 = vsyncpa [#allocation5], 1
    %s1423 = scalar_lea.sflag [#allocation5], 1
    %1424 = vsyncpa %s1423, 1

</llo_original>
